<compile_context>
chip_gen: v7x
topology: tpu7x:2x2x1
jax: 0.10.0
libtpu: 0.0.40
codegen_flags: <defaults>
</compile_context>

<pallas_src>
import numpy as np
import jax
import jax.numpy as jnp
from jax import lax
from jax.experimental import pallas as pl
from jax.experimental.pallas import tpu as pltpu


LINEAR_TILE = 1024       # row tile for the per-point linear kernels
SCATTER_CHUNK = 512      # rows per grid step of the segmented reduction
_VMEM_CACHE = []


def _round_up(x, m):
    return ((x + m - 1) // m) * m


def _vmem_limit():
    """~75% of this generation's physical VMEM (no flat 64 MiB request)."""
    if not _VMEM_CACHE:
        try:
            cap = int(pltpu.get_tpu_info().vmem_capacity_bytes)
        except Exception:
            cap = 64 * 1024 * 1024
        _VMEM_CACHE.append(max(32 * 1024 * 1024, (cap * 3) // 4))
    return _VMEM_CACHE[0]


# ----------------------------------------------------------------------------
# Pallas kernel 1: VFE layer 0 -- feature construction + Linear + BN + ReLU
# ----------------------------------------------------------------------------
def _vfe0_kernel(p_ref, cen_ref, vmean_ref, w0_ref, scale_ref, shift_ref, o_ref):
    p = p_ref[...]                                     # [T, 4]  (x, y, z, r)
    pxyz = p[:, 0:3]
    feat = jnp.concatenate(
        [p, pxyz - vmean_ref[...], pxyz - cen_ref[...]], axis=1)   # [T, 10]
    y = jnp.dot(feat, w0_ref[...], preferred_element_type=jnp.float32)
    o_ref[...] = jnp.maximum(y * scale_ref[...] + shift_ref[...], 0.0)


def vfe_layer0(pts, center_xyz, vmean_pt, w0, scale, shift, *, tile=LINEAR_TILE):
    """relu((concat([p, p-vmean, p-vcenter]) @ w0) * scale + shift), fused."""
    n = pts.shape[0]
    c0 = w0.shape[1]
    assert n % tile == 0
    return pl.pallas_call(
        _vfe0_kernel,
        out_shape=jax.ShapeDtypeStruct((n, c0), jnp.float32),
        grid=(n // tile,),
        in_specs=[
            pl.BlockSpec((tile, 4), lambda i: (i, 0)),
            pl.BlockSpec((tile, 3), lambda i: (i, 0)),
            pl.BlockSpec((tile, 3), lambda i: (i, 0)),
            pl.BlockSpec((10, c0), lambda i: (0, 0)),
            pl.BlockSpec((1, c0), lambda i: (0, 0)),
            pl.BlockSpec((1, c0), lambda i: (0, 0)),
        ],
        out_specs=pl.BlockSpec((tile, c0), lambda i: (i, 0)),
        compiler_params=pltpu.CompilerParams(
            dimension_semantics=("parallel",),
            vmem_limit_bytes=_vmem_limit()),
    )(pts, center_xyz, vmean_pt, w0, scale.reshape(1, -1), shift.reshape(1, -1))


# ----------------------------------------------------------------------------
# Pallas kernel 2: VFE layer 1 -- Linear(concat(pt0, vmax0[inv])) as two matmuls
# ----------------------------------------------------------------------------
def _linear2_bn_relu_kernel(xa_ref, xb_ref, wa_ref, wb_ref, scale_ref, shift_ref,
                            o_ref):
    y = jnp.dot(xa_ref[...], wa_ref[...], preferred_element_type=jnp.float32)
    y = y + jnp.dot(xb_ref[...], wb_ref[...], preferred_element_type=jnp.float32)
    o_ref[...] = jnp.maximum(y * scale_ref[...] + shift_ref[...], 0.0)


def linear2_bn_relu(xa, xb, wa, wb, scale, shift, *, tile=LINEAR_TILE):
    n, _ = xa.shape
    cb = xb.shape[1]
    ca = xa.shape[1]
    cout = wa.shape[1]
    assert n % tile == 0 and xb.shape[0] == n
    return pl.pallas_call(
        _linear2_bn_relu_kernel,
        out_shape=jax.ShapeDtypeStruct((n, cout), jnp.float32),
        grid=(n // tile,),
        in_specs=[
            pl.BlockSpec((tile, ca), lambda i: (i, 0)),
            pl.BlockSpec((tile, cb), lambda i: (i, 0)),
            pl.BlockSpec((ca, cout), lambda i: (0, 0)),
            pl.BlockSpec((cb, cout), lambda i: (0, 0)),
            pl.BlockSpec((1, cout), lambda i: (0, 0)),
            pl.BlockSpec((1, cout), lambda i: (0, 0)),
        ],
        out_specs=pl.BlockSpec((tile, cout), lambda i: (i, 0)),
        compiler_params=pltpu.CompilerParams(
            dimension_semantics=("parallel",),
            vmem_limit_bytes=_vmem_limit()),
    )(xa, xb, wa, wb, scale.reshape(1, -1), shift.reshape(1, -1))


# ----------------------------------------------------------------------------
# Pallas kernel 3: sorted segmented reduction (sum / max), points -> voxels
#   Rows are sorted by a DENSE segment id.  Per 512-row chunk:
#     * one SMEM scalar read (8-aligned chunk base id, scalar-prefetched)
#     * ids come in as VMEM inputs; one-hot selection built with vector compares
#     * sum:   selT [span, chunk] @ feats          (one MXU matmul)
#     * max:   segmented running max (log-step shifts) + last-row selection matmul
#     * ONE 8-aligned dynamic [span, d] RMW into the resident accumulator
# ----------------------------------------------------------------------------
def _make_seg_sum_kernel(chunk, span):
    def kernel(base8_ref, ids_ref, f_ref, o_ref):
        step = pl.program_id(0)

        @pl.when(step == 0)
        def _init():
            o_ref[...] = jnp.zeros_like(o_ref)

        base8 = base8_ref[step]
        lid = ids_ref[...][0, 0:1, :] - base8                       # [1, chunk]
        span_iota = lax.broadcasted_iota(jnp.int32, (span, chunk), 0)
        sel = (span_iota == lid).astype(jnp.float32)                # [span, chunk]
        partial = jnp.dot(sel, f_ref[...], preferred_element_type=jnp.float32)
        start = pl.multiple_of(base8, 8)
        cur = o_ref[pl.ds(start, span), :]
        o_ref[pl.ds(start, span), :] = cur + partial

    return kernel


def _make_seg_max_kernel(chunk, span):
    def kernel(base8_ref, idsf_ref, starts_ref, f_ref, o_ref):
        step = pl.program_id(0)

        @pl.when(step == 0)
        def _init():
            o_ref[...] = jnp.zeros_like(o_ref)

        d = f_ref.shape[1]
        v = f_ref[...]                                              # [chunk, d]
        flag = starts_ref[...]                                      # [chunk, 1]
        row_iota = lax.broadcasted_iota(jnp.int32, (chunk, 1), 0)
        k = 1
        while k < chunk:            # segmented (Hillis-Steele) running max
            v_sh = jnp.concatenate(
                [jnp.zeros((k, d), v.dtype), v[:chunk - k, :]], axis=0)
            f_sh = jnp.concatenate(
                [jnp.zeros((k, 1), flag.dtype), flag[:chunk - k, :]], axis=0)
            ok = row_iota >= k
            comb = ok & (flag == 0.0)
            v = jnp.where(comb, jnp.maximum(v, v_sh), v)
            flag = jnp.where(ok, jnp.maximum(flag, f_sh), flag)
            k *= 2

        base8 = base8_ref[step]
        # idsf carries the real id on chunk-local "last row of segment" rows and
        # -1 elsewhere, so this one-hot selects exactly one row per segment.
        lidf = idsf_ref[...][0, 0:1, :] - base8                     # [1, chunk]
        span_iota = lax.broadcasted_iota(jnp.int32, (span, chunk), 0)
        lastT = (span_iota == lidf).astype(jnp.float32)             # [span, chunk]
        partial = jnp.dot(lastT, v, preferred_element_type=jnp.float32)
        start = pl.multiple_of(base8, 8)
        cur = o_ref[pl.ds(start, span), :]
        o_ref[pl.ds(start, span), :] = jnp.maximum(cur, partial)

    return kernel


def build_seg_meta(inv_p, num_segments, chunk=SCATTER_CHUNK):
    """Host-side metadata for the sorted segmented reduction.

    inv_p: [Np] int32, non-decreasing, dense in [0, num_segments); padded rows
           carry id == num_segments; Np a multiple of `chunk`.
    """
    npad = inv_p.shape[0]
    assert npad % chunk == 0
    n_chunks = npad // chunk
    inv2 = inv_p.reshape(n_chunks, chunk)
    base8 = ((inv2[:, 0].astype(np.int64) // 8) * 8).astype(np.int32)
    mpad = int(base8.max()) + chunk + 8
    mpad = _round_up(max(mpad, num_segments + 1), 8)

    starts = np.zeros((npad, 1), np.float32)            # segment-start flags
    starts[0, 0] = 1.0
    starts[1:, 0] = (inv_p[1:] != inv_p[:-1]).astype(np.float32)

    last = np.zeros((npad,), bool)                      # chunk-local flush rows
    last[-1] = True
    last[:-1] = inv_p[1:] != inv_p[:-1]
    last = last.reshape(n_chunks, chunk).copy()
    last[:, -1] = True
    ids_flush = np.where(last, inv2, -1).astype(np.int32)

    # replicate across 8 sublanes so the VMEM block is (8, chunk)-tiled
    ids_rep = np.repeat(inv2[:, None, :].astype(np.int32), 8, axis=1)
    idsf_rep = np.repeat(ids_flush[:, None, :], 8, axis=1)
    return dict(chunk=chunk, n_chunks=n_chunks, mpad=mpad, m=num_segments,
                base8=jnp.asarray(base8),
                ids_rep=jnp.asarray(ids_rep),
                idsf_rep=jnp.asarray(idsf_rep),
                starts=jnp.asarray(starts))


def segment_reduce_sorted(feats, seg, op):
    """Per-segment sum/max of rows sorted by dense segment id.

    Returns the padded [seg['mpad'], D] result; callers slice [:m].
    op='max' assumes inputs >= 0 (post-ReLU), so 0 is a valid identity.
    """
    n, d = feats.shape
    chunk = seg["chunk"]
    span = chunk + 8
    n_chunks, mpad = seg["n_chunks"], seg["mpad"]
    assert n == n_chunks * chunk
    feats = feats.astype(jnp.float32)

    if op == "sum":
        kernel = _make_seg_sum_kernel(chunk, span)
        in_specs = [
            pl.BlockSpec((1, 8, chunk), lambda i, b: (i, 0, 0)),
            pl.BlockSpec((chunk, d), lambda i, b: (i, 0)),
        ]
        operands = (seg["ids_rep"], feats)
    else:
        kernel = _make_seg_max_kernel(chunk, span)
        in_specs = [
            pl.BlockSpec((1, 8, chunk), lambda i, b: (i, 0, 0)),
            pl.BlockSpec((chunk, 1), lambda i, b: (i, 0)),
            pl.BlockSpec((chunk, d), lambda i, b: (i, 0)),
        ]
        operands = (seg["idsf_rep"], seg["starts"], feats)

    # TODO(synk): v7x megacore split (leading parallel axis with per-core
    # disjoint chunk / output ranges) and output tiling over segment ranges for
    # very large voxel counts (bounds the resident accumulator).
    return pl.pallas_call(
        kernel,
        out_shape=jax.ShapeDtypeStruct((mpad, d), jnp.float32),
        grid_spec=pltpu.PrefetchScalarGridSpec(
            num_scalar_prefetch=1,
            grid=(n_chunks,),
            in_specs=in_specs,
            out_specs=pl.BlockSpec((mpad, d), lambda i, b: (0, 0))),
        compiler_params=pltpu.CompilerParams(
            dimension_semantics=("arbitrary",),
            vmem_limit_bytes=_vmem_limit()),
    )(seg["base8"], *operands)


# ----------------------------------------------------------------------------
# Host-side (NumPy) glue: dynamic voxelization, unique coords, sorting, matching
# ----------------------------------------------------------------------------
def voxelize_np(points, batch_size, pc_range, voxel_size):
    """points: [N,5] (batch, x, y, z, r). Returns (feats [N,4], coors [N,4] b,z,y,x)."""
    feats, coors = [], []
    for b in range(batch_size):
        mask = points[:, 0] == b
        p = points[mask, 1:]
        c = np.floor((p[:, :3] - pc_range[:3]) / voxel_size).astype(np.int32)
        c = c[:, ::-1]                                   # (z, y, x)
        c = np.concatenate([np.full((c.shape[0], 1), b, np.int32), c], axis=1)
        feats.append(p.astype(np.float32))
        coors.append(c)
    return np.concatenate(feats, 0), np.concatenate(coors, 0)


def prepare_encoder_inputs(points, batch_size, pc_range, voxel_size,
                           tile=LINEAR_TILE, chunk=SCATTER_CHUNK):
    """Voxelize, build dense voxel ids, sort points by voxel id, pad, precompute
    voxel-center coords and the segmented-reduce metadata."""
    feats, coors = voxelize_np(points, batch_size, pc_range, voxel_size)
    uniq, inv = np.unique(coors, axis=0, return_inverse=True)
    inv = inv.reshape(-1).astype(np.int32)
    m = uniq.shape[0]
    counts = np.bincount(inv, minlength=m).astype(np.float32)

    order = np.argsort(inv, kind="stable")               # sort points by voxel id
    feats_s, coors_s, inv_s = feats[order], coors[order], inv[order]

    vx, vy, vz = [float(v) for v in voxel_size]
    x_off = vx / 2.0 + float(pc_range[0])
    y_off = vy / 2.0 + float(pc_range[1])
    z_off = vz / 2.0 + float(pc_range[2])
    center = np.stack([coors_s[:, 3] * vx + x_off,
                       coors_s[:, 2] * vy + y_off,
                       coors_s[:, 1] * vz + z_off], axis=1).astype(np.float32)

    n = feats_s.shape[0]
    npad = _round_up(max(n, 1), tile)
    pad = npad - n
    feats_p = np.concatenate([feats_s, np.zeros((pad, 4), np.float32)], 0)
    center_p = np.concatenate([center, np.zeros((pad, 3), np.float32)], 0)
    inv_p = np.concatenate([inv_s, np.full((pad,), m, np.int32)], 0)

    seg = build_seg_meta(inv_p, m, chunk)
    counts_p = np.ones((seg["mpad"],), np.float32)
    counts_p[:m] = np.maximum(counts, 1.0)
    # TODO(synk): three independent unique/sort passes per frame serialize with
    # the device; derive med/low orders from the top-level sort.
    return dict(uniq=uniq.astype(np.int32), m=m, counts_pad=counts_p,
                feats=feats_p, center=center_p, inv=inv_p, seg=seg)


def _encode_keys(coors, dims):
    b = coors[:, 0].astype(np.int64)
    z = coors[:, 1].astype(np.int64)
    y = coors[:, 2].astype(np.int64)
    x = coors[:, 3].astype(np.int64)
    return ((b * dims[0] + z) * dims[1] + y) * dims[2] + x


def match_children(top_coors, sub_coors, div):
    """Vectorized MultiFusionVoxel.find_coordinate_indices.

    Returns (child indices into sub voxels, parent top-voxel index per child)."""
    mapped = sub_coors.copy()
    mapped[:, 1:] = sub_coors[:, 1:] // div              # == torch.div(...).floor()
    dims = tuple(int(max(top_coors[:, k].max(), mapped[:, k].max())) + 1
                 for k in (1, 2, 3))
    top_keys = _encode_keys(top_coors, dims)
    sub_keys = _encode_keys(mapped, dims)
    pos = np.searchsorted(top_keys, sub_keys)
    pos = np.clip(pos, 0, top_keys.shape[0] - 1)
    ok = top_keys[pos] == sub_keys
    idx = np.nonzero(ok)[0].astype(np.int32)
    parent = pos[ok].astype(np.int32)
    return idx, parent


# ----------------------------------------------------------------------------
# DynamicScatterVFE (with_cluster_center=True, with_voxel_center=True,
# with_distance=False, scatter mode='max', 2 VFE layers, eval-mode BN folded)
# ----------------------------------------------------------------------------
def dynamic_scatter_vfe(enc, params):
    seg = enc["seg"]
    m = enc["m"]
    pts = jnp.asarray(enc["feats"])                      # [Np, 4] sorted + padded
    center = jnp.asarray(enc["center"])                  # [Np, 3] voxel centers
    inv = jnp.asarray(enc["inv"], jnp.int32)             # [Np], pad id == m
    counts = jnp.asarray(enc["counts_pad"])              # [mpad]

    # per-voxel mean of (x, y, z) -> cluster-center offsets
    vsum = segment_reduce_sorted(pts, seg, "sum")        # [mpad, 4]
    vmean = vsum / counts[:, None]
    # TODO(synk): fuse this gather into the layer-0 kernel via a per-chunk
    # contiguous voxel window (ids are sorted).
    vmean_pt = vmean[inv][:, :3]                         # [Np, 3]

    # VFE layer 0: feature construction + Linear + BN + ReLU (fused), then max
    pt0 = vfe_layer0(pts, center, vmean_pt,
                     params["w0"], params["scale0"], params["shift0"])
    vmax0 = segment_reduce_sorted(pt0, seg, "max")       # [mpad, c0]

    # VFE layer 1: Linear(concat(pt0, vmax0[inv])) + BN + ReLU as two matmuls
    # TODO(synk): fuse the vmax0[inv] gather (contiguous per-chunk voxel window).
    pt1 = linear2_bn_relu(pt0, vmax0[inv], params["w1a"], params["w1b"],
                          params["scale1"], params["shift1"])
    return segment_reduce_sorted(pt1, seg, "max")[:m]


def init_vfe_params(key, in_ch, feat_channels, eps=1e-3):
    c0, c1 = feat_channels
    k0, k1a, k1b = jax.random.split(key, 3)
    return dict(
        w0=jax.random.normal(k0, (in_ch, c0), jnp.float32) * 0.05,
        # second Linear split into its two halves: per-point feats / gathered max
        w1a=jax.random.normal(k1a, (c0, c1), jnp.float32) * 0.05,
        w1b=jax.random.normal(k1b, (c0, c1), jnp.float32) * 0.05,
        scale0=jnp.ones((c0,), jnp.float32) / jnp.sqrt(1.0 + eps),
        shift0=jnp.zeros((c0,), jnp.float32),
        scale1=jnp.ones((c1,), jnp.float32) / jnp.sqrt(1.0 + eps),
        shift1=jnp.zeros((c1,), jnp.float32),
    )


# ----------------------------------------------------------------------------
# scatter_v2(mode='avg', fusion=True) over matched children, aligned to uniq_top
# ----------------------------------------------------------------------------
def fused_child_mean(vfeat_child, idx, parent, m_top, *, chunk=SCATTER_CHUNK):
    c = vfeat_child.shape[1]
    if idx.shape[0] == 0:
        return jnp.zeros((m_top, c), jnp.float32)
    # dense-remap parent ids so gaps (top voxels without matched children due to
    # rounding) cannot silently corrupt the sorted reduce; missing parents -> 0.
    uniq_par, par_dense = np.unique(parent, return_inverse=True)
    m_dense = uniq_par.shape[0]
    order = np.argsort(par_dense, kind="stable")
    idx_s = idx[order].astype(np.int32)
    par_s = par_dense[order].astype(np.int32)
    k = idx_s.shape[0]
    kpad = _round_up(k, chunk)
    idx_p = np.concatenate([idx_s, np.zeros((kpad - k,), np.int32)])
    par_p = np.concatenate([par_s, np.full((kpad - k,), m_dense, np.int32)])

    seg = build_seg_meta(par_p, m_dense, chunk)
    cnt = np.bincount(par_dense, minlength=m_dense).astype(np.float32)
    counts_p = np.ones((seg["mpad"],), np.float32)
    counts_p[:m_dense] = np.maximum(cnt, 1.0)

    # TODO(synk): fold this row gather into the reduce kernel instead of an
    # [kpad, C] HBM intermediate.
    rows = vfeat_child[jnp.asarray(idx_p)]
    sums = segment_reduce_sorted(rows, seg, "sum")
    means = (sums / jnp.asarray(counts_p)[:, None])[:m_dense]
    out = jnp.zeros((m_top, c), jnp.float32)
    return out.at[jnp.asarray(uniq_par.astype(np.int32))].set(means)


# ----------------------------------------------------------------------------
# MultiFusionVoxel forward
# ----------------------------------------------------------------------------
def multi_fusion_voxel_forward(points_np, batch_size, cfg,
                               params_top, params_med, params_low):
    pc_range = cfg["pc_range"]
    vs_top, vs_med, vs_low = cfg["voxel_size"], cfg["sub_med"], cfg["sub_low"]

    enc_top = prepare_encoder_inputs(points_np, batch_size, pc_range, vs_top)
    enc_med = prepare_encoder_inputs(points_np, batch_size, pc_range, vs_med)
    enc_low = prepare_encoder_inputs(points_np, batch_size, pc_range, vs_low)

    vfeat_top = dynamic_scatter_vfe(enc_top, params_top)   # [M_top, 128]
    vfeat_med = dynamic_scatter_vfe(enc_med, params_med)   # [M_med, 64]
    vfeat_low = dynamic_scatter_vfe(enc_low, params_low)   # [M_low, 64]

    idx_med, parent_med = match_children(enc_top["uniq"], enc_med["uniq"], 2)
    idx_low, parent_low = match_children(enc_top["uniq"], enc_low["uniq"], 4)

    m_top = enc_top["m"]
    voxel_med_mean = fused_child_mean(vfeat_med, idx_med, parent_med, m_top)
    voxel_low_mean = fused_child_mean(vfeat_low, idx_low, parent_low, m_top)
    merge = jnp.concatenate([voxel_med_mean, voxel_low_mean], axis=1)  # [M_top,128]

    return [vfeat_top, merge], jnp.asarray(enc_top["uniq"])


# ----------------------------------------------------------------------------
if __name__ == "__main__":
    key = jax.random.PRNGKey(0)
    kxyz, kint, kp1, kp2, kp3 = jax.random.split(key, 5)

    batch_size = 2
    n_per_batch = 128
    n_total = batch_size * n_per_batch

    pc_range = np.array([0.0, 0.0, 0.0, 8.0, 8.0, 4.0], np.float32)
    vs_top = np.array([1.0, 1.0, 1.0], np.float32)
    vs_med = vs_top / 2.0
    vs_low = vs_top / 4.0

    lo = jnp.array([0.05, 0.05, 0.05], jnp.float32)
    hi = jnp.array([7.95, 7.95, 3.95], jnp.float32)
    xyz = lo + jax.random.uniform(kxyz, (n_total, 3), jnp.float32) * (hi - lo)
    inten = jax.random.uniform(kint, (n_total, 1), jnp.float32)
    bcol = jnp.repeat(jnp.arange(batch_size, dtype=jnp.float32), n_per_batch)[:, None]
    points = np.asarray(jnp.concatenate([bcol, xyz, inten], axis=1), dtype=np.float32)

    # voxel_encoder: feat_channels [64, 128]; middle/low encoders: [32, 64]
    params_top = init_vfe_params(kp1, 10, (64, 128))
    params_med = init_vfe_params(kp2, 10, (32, 64))
    params_low = init_vfe_params(kp3, 10, (32, 64))

    cfg = dict(pc_range=pc_range, voxel_size=vs_top, sub_med=vs_med, sub_low=vs_low)
    feat_list, feature_coors = multi_fusion_voxel_forward(
        points, batch_size, cfg, params_top, params_med, params_low)

    voxel_features, merge_voxel_mid_low_features = feat_list
    voxel_features = jax.block_until_ready(voxel_features)
    merge_voxel_mid_low_features = jax.block_until_ready(merge_voxel_mid_low_features)
    feature_coors = jax.block_until_ready(feature_coors)

    assert voxel_features.shape[1] == 128
    assert merge_voxel_mid_low_features.shape[1] == 128
    assert (voxel_features.shape[0] == merge_voxel_mid_low_features.shape[0]
            == feature_coors.shape[0])
    assert bool(jnp.all(jnp.isfinite(voxel_features)))
    assert bool(jnp.all(jnp.isfinite(merge_voxel_mid_low_features)))

    print("KERNEL_OK")
</pallas_src>

<mosaic_0001>
module attributes {stable_mosaic.version = 11 : i64} {
  func.func @kernel(%arg0: i32, %arg1: memref<2xi32, #tpu.memory_space<smem>>, %arg2: memref<1x8x512xi32, #tpu.memory_space<vmem>>, %arg3: memref<512x4xf32, #tpu.memory_space<vmem>>, %arg4: memref<720x4xf32, #tpu.memory_space<vmem>>) attributes {dimension_semantics = [#tpu.dimension_semantics<arbitrary>], iteration_bounds = array<i64: 2>, scalar_prefetch = 1 : i64, scratch_operands = 0 : i64, tpu.core_type = #tpu.core_type<tc>, window_params = [{transform_indices = @transform_0, window_bounds = array<i64: 1, 8, 512>}, {transform_indices = @transform_1, window_bounds = array<i64: 512, 4>}, {pipeline_mode = #tpu.pipeline_mode<synchronous>, transform_indices = @transform_2, window_bounds = array<i64: 720, 4>}]} {
    %c0_i32 = arith.constant 0 : i32
    %0 = arith.cmpi eq, %arg0, %c0_i32 : i32
    %1 = arith.extui %0 : i1 to i32
    %c0_i32_0 = arith.constant 0 : i32
    %2 = arith.cmpi ne, %1, %c0_i32_0 : i32
    scf.if %2 {
      %cst_7 = arith.constant 0.000000e+00 : f32
      %23 = vector.broadcast %cst_7 : f32 to vector<720x4xf32>
      %c0_8 = arith.constant 0 : index
      %c0_9 = arith.constant 0 : index
      %24 = vector.load %arg4[%c0_8, %c0_9] : memref<720x4xf32, #tpu.memory_space<vmem>>, vector<720x4xf32>
      tpu.vector_store %arg4[%c0_8, %c0_9], %23 {strides = array<i32>} : memref<720x4xf32, #tpu.memory_space<vmem>>, vector<720x4xf32>,
    } else {
    }
    %3 = arith.index_cast %arg0 : i32 to index
    %4 = memref.load %arg1[%3] : memref<2xi32, #tpu.memory_space<smem>>
    %c0 = arith.constant 0 : index
    %c0_1 = arith.constant 0 : index
    %c0_2 = arith.constant 0 : index
    %5 = vector.load %arg2[%c0, %c0_1, %c0_2] : memref<1x8x512xi32, #tpu.memory_space<vmem>>, vector<1x8x512xi32>
    %6 = vector.extract_strided_slice %5 {offsets = [0, 0, 0], sizes = [1, 1, 512], strides = [1, 1, 1]} : vector<1x8x512xi32> to vector<1x1x512xi32>
    %7 = vector.shape_cast %6 : vector<1x1x512xi32> to vector<1x512xi32>
    %8 = vector.broadcast %4 : i32 to vector<1x512xi32>
    %9 = arith.subi %7, %8 : vector<1x512xi32>
    %10 = tpu.iota {dimensions = array<i32: 0>} : vector<520x512xi32>
    %11 = vector.broadcast %9 : vector<1x512xi32> to vector<520x512xi32>
    %12 = arith.cmpi eq, %10, %11 : vector<520x512xi32>
    %13 = arith.extui %12 : vector<520x512xi1> to vector<520x512xi32>
    %14 = arith.sitofp %13 : vector<520x512xi32> to vector<520x512xf32>
    %c0_3 = arith.constant 0 : index
    %c0_4 = arith.constant 0 : index
    %15 = vector.load %arg3[%c0_3, %c0_4] : memref<512x4xf32, #tpu.memory_space<vmem>>, vector<512x4xf32>
    %cst = arith.constant dense<0.000000e+00> : vector<520x4xf32>
    %16 = tpu.matmul %14, %15, %cst {dimension_numbers = #tpu.dot_dimension_numbers<[1], [0], [0], [1], [0, 0, 1, 1], [], []>} : vector<520x512xf32>, vector<512x4xf32>, vector<520x4xf32> -> vector<520x4xf32>
    %17 = tpu.assume_multiple %4, 8 : i32
    %18 = arith.index_cast %17 : i32 to index
    %c0_5 = arith.constant 0 : index
    %19 = vector.load %arg4[%18, %c0_5] : memref<720x4xf32, #tpu.memory_space<vmem>>, vector<520x4xf32>
    %20 = arith.addf %19, %16 : vector<520x4xf32>
    %21 = arith.index_cast %17 : i32 to index
    %c0_6 = arith.constant 0 : index
    %22 = vector.load %arg4[%21, %c0_6] : memref<720x4xf32, #tpu.memory_space<vmem>>, vector<520x4xf32>
    tpu.vector_store %arg4[%21, %c0_6], %20 {strides = array<i32>} : memref<720x4xf32, #tpu.memory_space<vmem>>, vector<520x4xf32>,
    return
  }
  func.func @transform_0(%arg0: i32, %arg1: memref<2xi32, #tpu.memory_space<smem>>) -> (i32, i32, i32) {
    %c0_i32 = arith.constant 0 : i32
    %c0_i32_0 = arith.constant 0 : i32
    %c0_i32_1 = arith.constant 0 : i32
    return %arg0, %c0_i32, %c0_i32_0 : i32, i32, i32
  }
  func.func @transform_1(%arg0: i32, %arg1: memref<2xi32, #tpu.memory_space<smem>>) -> (i32, i32) {
    %c0_i32 = arith.constant 0 : i32
    %c0_i32_0 = arith.constant 0 : i32
    return %arg0, %c0_i32 : i32, i32
  }
  func.func @transform_2(%arg0: i32, %arg1: memref<2xi32, #tpu.memory_space<smem>>) -> (i32, i32) {
    %c0_i32 = arith.constant 0 : i32
    %c0_i32_0 = arith.constant 0 : i32
    %c0_i32_1 = arith.constant 0 : i32
    return %c0_i32, %c0_i32_0 : i32, i32
  }
}

</mosaic_0001>

<llo_original>
// kernel: tpu_custom_call.1
$region0: #{tpu_custom_call.1}
  #allocation0 [shape = 'u32[]', space=smem, size = 0x4, offset = 0x4, fixed_abs, tag = 'smem constant byte address 0x4 - core index']
  #allocation1 [shape = 'u32[144,128]{1,0:T(1,128)}', space=vmem, size = 0x12000, scoped, tag = 'internal scratch']
  #allocation2 [shape = 's32[1]{0}', space=sflag, size = 0x4, scoped, tag = 'scoped memory for tpu_custom_call.1']
  #allocation3 [shape = 'u8[512]{0}', space=smem, size = 0x200, scoped, tag = 'prefetched SMEM operand 0']
  %s0 = inlined_call_operand.vmem [shape: s32[2], index: 0, kind: input, shape index: {}]
  %s1 = inlined_call_operand.vmem [shape: s32[2,8,512], index: 1, kind: input, shape index: {}]
  %s2 = inlined_call_operand.vmem [shape: f32[1024,4], index: 2, kind: input, shape index: {}]
  %s3 = inlined_call_operand.vmem [shape: f32[720,4], index: 3, kind: output, shape index: {}]
  %s4 = sld [smem:[#allocation0]]
  $region45: #{tpu_custom_call.1} parent=0
    _
  %s6 = ssub.s32 1, %s4
  %s7 = scalar_select 0, %s6, %s4
  %s8 = sshll.u32 %s0, 4
  %s9 = int_to_ptr.vmem [resolvable:$true] %s8
  %11 = dma.vmem_to_smem %s9, 16, [#allocation3], [#allocation2]
  %12 = dma.done [#allocation2], 16
  %13 = sfence
  loop: start=0, step=1, limit=4
  $region2: #{tpu_custom_call.1} parent=0 // loop_pre_header
    _
  $region3: #{tpu_custom_call.1} parent=0 // loop_header
    %s15 = sphi 0, %s19
    %p16 = scmp.ge.s32.totalorder %s15, 4
    %s25 = sphi 0, %s27
    %s28 = sphi 0, %s25
    %s29 = sphi 0, %s28
    %s45 = sphi 0, %s29
    %s51 = sphi 0, %s53
    %s54 = sphi 0, %s51
    %s55 = sphi 0, %s54
    %s71 = sphi 0, %s55
    %s75 = sphi 0, %s75
    %s77 = sphi 0, %s75
    %s78 = sphi 0, %s77
    %s92 = sphi 0, %s78
  $region4: #{tpu_custom_call.1} parent=0 // loop_header_branch
    %18 = sbr.rel (%p16) target = $region8
  $region5: #{tpu_custom_call.1} parent=0 // loop_body
    %s20 = ssub.s32 %s15, 1
    %s21 = ssub.s32 %s15, 2
    %s22 = sadd.s32 %s15, 1
    %s23 = ssub.s32 %s15, %s22
    %p24 = scmp.eq.s32.totalorder %s23, 0
    %s26 = sadd.s32 %s25, 1
    %s27 = scalar_select %p24, %s25, %s26
    %p30 = pneg %p24
    %p31 = scmp.eq.s32.totalorder %s15, 1
    %p32 = por %p30, %p31
    %p33 = scmp.ne.s32.totalorder %s25, %s28
    %p34 = scmp.eq.s32.totalorder %s15, 0
    %p35 = por %p33, %p34
    %p36 = scmp.ne.s32.totalorder %s25, %s28
    %p37 = scmp.eq.s32.totalorder %s20, 1
    %p38 = por %p36, %p37
    %p39 = scmp.ne.s32.totalorder %s28, %s29
    %p40 = scmp.eq.s32.totalorder %s20, 0
    %p41 = por %p39, %p40
    %p42 = scmp.ne.s32.totalorder %s28, %s29
    %p43 = scmp.eq.s32.totalorder %s21, 1
    %p44 = por %p42, %p43
    %p46 = scmp.ne.s32.totalorder %s29, %s45
    %p47 = scmp.eq.s32.totalorder %s21, 0
    %p48 = por %p46, %p47
    %s49 = ssub.s32 %s15, %s22
    %p50 = scmp.eq.s32.totalorder %s49, 0
    %s52 = sadd.s32 %s51, 1
    %s53 = scalar_select %p50, %s51, %s52
    %p56 = pneg %p50
    %p57 = scmp.eq.s32.totalorder %s15, 1
    %p58 = por %p56, %p57
    %p59 = scmp.ne.s32.totalorder %s51, %s54
    %p60 = scmp.eq.s32.totalorder %s15, 0
    %p61 = por %p59, %p60
    %p62 = scmp.ne.s32.totalorder %s51, %s54
    %p63 = scmp.eq.s32.totalorder %s20, 1
    %p64 = por %p62, %p63
    %p65 = scmp.ne.s32.totalorder %s54, %s55
    %p66 = scmp.eq.s32.totalorder %s20, 0
    %p67 = por %p65, %p66
    %p68 = scmp.ne.s32.totalorder %s54, %s55
    %p69 = scmp.eq.s32.totalorder %s21, 1
    %p70 = por %p68, %p69
    %p72 = scmp.ne.s32.totalorder %s55, %s71
    %p73 = scmp.eq.s32.totalorder %s21, 0
    %p74 = por %p72, %p73
    %s76 = sadd.s32 %s75, 1
    %p79 = scmp.eq.s32.totalorder %s15, 1
    %p80 = scmp.ne.s32.totalorder %s75, %s77
    %p81 = scmp.eq.s32.totalorder %s15, 0
    %p82 = por %p80, %p81
    %p83 = scmp.ne.s32.totalorder %s75, %s77
    %p84 = scmp.eq.s32.totalorder %s20, 1
    %p85 = por %p83, %p84
    %p86 = scmp.ne.s32.totalorder %s77, %s78
    %p87 = scmp.eq.s32.totalorder %s20, 0
    %p88 = por %p86, %p87
    %p89 = scmp.ne.s32.totalorder %s77, %s78
    %p90 = scmp.eq.s32.totalorder %s21, 1
    %p91 = por %p89, %p90
    %p93 = scmp.ne.s32.totalorder %s78, %s92
    %p94 = scmp.eq.s32.totalorder %s21, 0
    %p95 = por %p93, %p94
    %p96 = scmp.le.s32.totalorder 1, %s15
    %p97 = scmp.lt.s32.totalorder %s15, 3
    %p98 = pnand %p96, %p97
    %p99 = pneg %p98
    // Predicated region
    $region9: #{tpu_custom_call.1} parent=5 // pred_check
      _
    $region10: #{tpu_custom_call.1} parent=5 // pred_check_branch
      %101 = sbr.rel (%p98) target = $region12
    $region11: #{tpu_custom_call.1} parent=5 // pred_region
      %s102 = ssub.s32 %s15, 1
    $region12: #{tpu_custom_call.1} parent=5 // pred_fallthru
      _
    %p103 = scmp.lt.s32.totalorder %s15, 2
    // Predicated region
    $region13: #{tpu_custom_call.1} parent=5 // pred_check
      %p104 = pneg %p103
    $region14: #{tpu_custom_call.1} parent=5 // pred_check_branch
      %106 = sbr.rel (%p104) target = $region16
    $region15: #{tpu_custom_call.1} parent=5 // pred_region
      // Predicated region
      $region17: #{tpu_custom_call.1} parent=15 // pred_check
        %p107 = pneg %p35
      $region18: #{tpu_custom_call.1} parent=15 // pred_check_branch
        %109 = sbr.rel (%p107) target = $region20
      $region19: #{tpu_custom_call.1} parent=15 // pred_region
        %p110 = scmp.lt.s32.totalorder %s15, 1
        %s111 = scalar_select %p110, %s15, 1
        %s112 = smul.addr %s111, 4
        %s113 = smul.addr %s112, 8
        %s114 = scalar_lea.vmem %s1, %s113
      $region20: #{tpu_custom_call.1} parent=15 // pred_fallthru
        _
      // Predicated region
      $region21: #{tpu_custom_call.1} parent=15 // pred_check
        %p115 = pneg %p61
      $region22: #{tpu_custom_call.1} parent=15 // pred_check_branch
        %117 = sbr.rel (%p115) target = $region24
      $region23: #{tpu_custom_call.1} parent=15 // pred_region
        %s118 = smul.u32 64, %s15
        %p119 = scmp.lt.s32.totalorder %s118, 127
        %s120 = scalar_select %p119, %s118, 127
        %s121 = smul.addr %s120, 8
        %s122 = scalar_lea.vmem %s2, %s121
        %s123 = smul.u32 64, %s15
      $region24: #{tpu_custom_call.1} parent=15 // pred_fallthru
        _
    $region16: #{tpu_custom_call.1} parent=5 // pred_fallthru
      _
    %p124 = scmp.le.s32.totalorder 1, %s15
    %p125 = scmp.lt.s32.totalorder %s15, 3
    %p126 = pnand %p124, %p125
    %p127 = pneg %p126
    // Predicated region
    $region25: #{tpu_custom_call.1} parent=5 // pred_check
      _
    $region26: #{tpu_custom_call.1} parent=5 // pred_check_branch
      %129 = sbr.rel (%p126) target = $region28
    $region27: #{tpu_custom_call.1} parent=5 // pred_region
      %s130 = ssub.s32 %s15, 1
      %p131 = scmp.lt.s32.totalorder %s20, 1
      %s132 = scalar_select %p131, %s20, 1
      %s133 = smul.addr %s132, 4
      %s134 = smul.addr %s133, 8
      %s135 = scalar_lea.vmem %s1, %s134
      %p136 = pneg %p41
      %p137 = pneg %p38
      %s138 = smul.u32 64, %s20
      %p139 = scmp.lt.s32.totalorder %s138, 127
      %s140 = scalar_select %p139, %s138, 127
      %s141 = smul.addr %s140, 8
      %s142 = scalar_lea.vmem %s2, %s141
      %p143 = pneg %p67
      %p144 = pneg %p64
      %p145 = pneg %p88
      %p146 = pneg %p85
      %p147 = scmp.lt.s32.totalorder %s20, 1
      %s148 = scalar_select %p147, %s20, 1
      %s149 = smul.addr %s148, 4
      %s150 = smul.addr %s149, 8
      %s151 = scalar_lea.vmem %s1, %s150
      %s152 = smul.u32 64, %s20
      %p153 = scmp.lt.s32.totalorder %s152, 127
      %s154 = scalar_select %p153, %s152, 127
      %s155 = smul.addr %s154, 8
      %s156 = scalar_lea.vmem %s2, %s155
      %s157 = smul.u32 64, %s20
      %p158 = scmp.eq.s32.totalorder %s20, 0
      // Predicated region
      $region29: #{tpu_custom_call.1} parent=27 // pred_check
        %p159 = pneg %p158
      $region30: #{tpu_custom_call.1} parent=27 // pred_check_branch
        %161 = sbr.rel (%p159) target = $region32
      $region31: #{tpu_custom_call.1} parent=27 // pred_region
        %vm162 = vcmask 31744
        %163 = vst.msk [vmem:[%s3] sm:$0xff] %vm162, 0.0
        %164 = vst.msk [vmem:[%s3 + $0x8] sm:$0xff] %vm162, 0.0
        %165 = vst.msk [vmem:[%s3 + $0x10] sm:$0xff] %vm162, 0.0
        %166 = vst.msk [vmem:[%s3 + $0x18] sm:$0xff] %vm162, 0.0
        %167 = vst.msk [vmem:[%s3 + $0x20] sm:$0xff] %vm162, 0.0
        %168 = vst.msk [vmem:[%s3 + $0x28] sm:$0xff] %vm162, 0.0
        %169 = vst.msk [vmem:[%s3 + $0x30] sm:$0xff] %vm162, 0.0
        %170 = vst.msk [vmem:[%s3 + $0x38] sm:$0xff] %vm162, 0.0
        %171 = vst.msk [vmem:[%s3 + $0x40] sm:$0xff] %vm162, 0.0
        %172 = vst.msk [vmem:[%s3 + $0x48] sm:$0xff] %vm162, 0.0
        %173 = vst.msk [vmem:[%s3 + $0x50] sm:$0xff] %vm162, 0.0
        %174 = vst.msk [vmem:[%s3 + $0x58] sm:$0xff] %vm162, 0.0
        %175 = vst.msk [vmem:[%s3 + $0x60] sm:$0xff] %vm162, 0.0
        %176 = vst.msk [vmem:[%s3 + $0x68] sm:$0xff] %vm162, 0.0
        %177 = vst.msk [vmem:[%s3 + $0x70] sm:$0xff] %vm162, 0.0
        %178 = vst.msk [vmem:[%s3 + $0x78] sm:$0xff] %vm162, 0.0
        %179 = vst.msk [vmem:[%s3 + $0x80] sm:$0xff] %vm162, 0.0
        %180 = vst.msk [vmem:[%s3 + $0x88] sm:$0xff] %vm162, 0.0
        %181 = vst.msk [vmem:[%s3 + $0x90] sm:$0xff] %vm162, 0.0
        %182 = vst.msk [vmem:[%s3 + $0x98] sm:$0xff] %vm162, 0.0
        %183 = vst.msk [vmem:[%s3 + $0xa0] sm:$0xff] %vm162, 0.0
        %184 = vst.msk [vmem:[%s3 + $0xa8] sm:$0xff] %vm162, 0.0
        %185 = vst.msk [vmem:[%s3 + $0xb0] sm:$0xff] %vm162, 0.0
        %186 = vst.msk [vmem:[%s3 + $0xb8] sm:$0xff] %vm162, 0.0
        %187 = vst.msk [vmem:[%s3 + $0xc0] sm:$0xff] %vm162, 0.0
        %188 = vst.msk [vmem:[%s3 + $0xc8] sm:$0xff] %vm162, 0.0
        %189 = vst.msk [vmem:[%s3 + $0xd0] sm:$0xff] %vm162, 0.0
        %190 = vst.msk [vmem:[%s3 + $0xd8] sm:$0xff] %vm162, 0.0
        %191 = vst.msk [vmem:[%s3 + $0xe0] sm:$0xff] %vm162, 0.0
        %192 = vst.msk [vmem:[%s3 + $0xe8] sm:$0xff] %vm162, 0.0
        %193 = vst.msk [vmem:[%s3 + $0xf0] sm:$0xff] %vm162, 0.0
        %194 = vst.msk [vmem:[%s3 + $0xf8] sm:$0xff] %vm162, 0.0
        %195 = vst.msk [vmem:[%s3 + $0x100] sm:$0xff] %vm162, 0.0
        %196 = vst.msk [vmem:[%s3 + $0x108] sm:$0xff] %vm162, 0.0
        %197 = vst.msk [vmem:[%s3 + $0x110] sm:$0xff] %vm162, 0.0
        %198 = vst.msk [vmem:[%s3 + $0x118] sm:$0xff] %vm162, 0.0
        %199 = vst.msk [vmem:[%s3 + $0x120] sm:$0xff] %vm162, 0.0
        %200 = vst.msk [vmem:[%s3 + $0x128] sm:$0xff] %vm162, 0.0
        %201 = vst.msk [vmem:[%s3 + $0x130] sm:$0xff] %vm162, 0.0
        %202 = vst.msk [vmem:[%s3 + $0x138] sm:$0xff] %vm162, 0.0
        %203 = vst.msk [vmem:[%s3 + $0x140] sm:$0xff] %vm162, 0.0
        %204 = vst.msk [vmem:[%s3 + $0x148] sm:$0xff] %vm162, 0.0
        %205 = vst.msk [vmem:[%s3 + $0x150] sm:$0xff] %vm162, 0.0
        %206 = vst.msk [vmem:[%s3 + $0x158] sm:$0xff] %vm162, 0.0
        %207 = vst.msk [vmem:[%s3 + $0x160] sm:$0xff] %vm162, 0.0
        %208 = vst.msk [vmem:[%s3 + $0x168] sm:$0xff] %vm162, 0.0
        %209 = vst.msk [vmem:[%s3 + $0x170] sm:$0xff] %vm162, 0.0
        %210 = vst.msk [vmem:[%s3 + $0x178] sm:$0xff] %vm162, 0.0
        %211 = vst.msk [vmem:[%s3 + $0x180] sm:$0xff] %vm162, 0.0
        %212 = vst.msk [vmem:[%s3 + $0x188] sm:$0xff] %vm162, 0.0
        %213 = vst.msk [vmem:[%s3 + $0x190] sm:$0xff] %vm162, 0.0
        %214 = vst.msk [vmem:[%s3 + $0x198] sm:$0xff] %vm162, 0.0
        %215 = vst.msk [vmem:[%s3 + $0x1a0] sm:$0xff] %vm162, 0.0
        %216 = vst.msk [vmem:[%s3 + $0x1a8] sm:$0xff] %vm162, 0.0
        %217 = vst.msk [vmem:[%s3 + $0x1b0] sm:$0xff] %vm162, 0.0
        %218 = vst.msk [vmem:[%s3 + $0x1b8] sm:$0xff] %vm162, 0.0
        %219 = vst.msk [vmem:[%s3 + $0x1c0] sm:$0xff] %vm162, 0.0
        %220 = vst.msk [vmem:[%s3 + $0x1c8] sm:$0xff] %vm162, 0.0
        %221 = vst.msk [vmem:[%s3 + $0x1d0] sm:$0xff] %vm162, 0.0
        %222 = vst.msk [vmem:[%s3 + $0x1d8] sm:$0xff] %vm162, 0.0
        %223 = vst.msk [vmem:[%s3 + $0x1e0] sm:$0xff] %vm162, 0.0
        %224 = vst.msk [vmem:[%s3 + $0x1e8] sm:$0xff] %vm162, 0.0
        %225 = vst.msk [vmem:[%s3 + $0x1f0] sm:$0xff] %vm162, 0.0
        %226 = vst.msk [vmem:[%s3 + $0x1f8] sm:$0xff] %vm162, 0.0
        %227 = vst.msk [vmem:[%s3 + $0x200] sm:$0xff] %vm162, 0.0
        %228 = vst.msk [vmem:[%s3 + $0x208] sm:$0xff] %vm162, 0.0
        %229 = vst.msk [vmem:[%s3 + $0x210] sm:$0xff] %vm162, 0.0
        %230 = vst.msk [vmem:[%s3 + $0x218] sm:$0xff] %vm162, 0.0
        %231 = vst.msk [vmem:[%s3 + $0x220] sm:$0xff] %vm162, 0.0
        %232 = vst.msk [vmem:[%s3 + $0x228] sm:$0xff] %vm162, 0.0
        %233 = vst.msk [vmem:[%s3 + $0x230] sm:$0xff] %vm162, 0.0
        %234 = vst.msk [vmem:[%s3 + $0x238] sm:$0xff] %vm162, 0.0
        %235 = vst.msk [vmem:[%s3 + $0x240] sm:$0xff] %vm162, 0.0
        %236 = vst.msk [vmem:[%s3 + $0x248] sm:$0xff] %vm162, 0.0
        %237 = vst.msk [vmem:[%s3 + $0x250] sm:$0xff] %vm162, 0.0
        %238 = vst.msk [vmem:[%s3 + $0x258] sm:$0xff] %vm162, 0.0
        %239 = vst.msk [vmem:[%s3 + $0x260] sm:$0xff] %vm162, 0.0
        %240 = vst.msk [vmem:[%s3 + $0x268] sm:$0xff] %vm162, 0.0
        %241 = vst.msk [vmem:[%s3 + $0x270] sm:$0xff] %vm162, 0.0
        %242 = vst.msk [vmem:[%s3 + $0x278] sm:$0xff] %vm162, 0.0
        %243 = vst.msk [vmem:[%s3 + $0x280] sm:$0xff] %vm162, 0.0
        %244 = vst.msk [vmem:[%s3 + $0x288] sm:$0xff] %vm162, 0.0
        %245 = vst.msk [vmem:[%s3 + $0x290] sm:$0xff] %vm162, 0.0
        %246 = vst.msk [vmem:[%s3 + $0x298] sm:$0xff] %vm162, 0.0
        %247 = vst.msk [vmem:[%s3 + $0x2a0] sm:$0xff] %vm162, 0.0
        %248 = vst.msk [vmem:[%s3 + $0x2a8] sm:$0xff] %vm162, 0.0
        %249 = vst.msk [vmem:[%s3 + $0x2b0] sm:$0xff] %vm162, 0.0
        %250 = vst.msk [vmem:[%s3 + $0x2b8] sm:$0xff] %vm162, 0.0
        %251 = vst.msk [vmem:[%s3 + $0x2c0] sm:$0xff] %vm162, 0.0
        %252 = vst.msk [vmem:[%s3 + $0x2c8] sm:$0xff] %vm162, 0.0
      $region32: #{tpu_custom_call.1} parent=27 // pred_fallthru
        _
      %s253 = sld [smem:[#allocation3 + %s20]]
      %v254 = vld [vmem:[%s151] sm:$0xff]
      %v255 = vld [vmem:[%s151 + $0x8] sm:$0xff]
      %v256 = vld [vmem:[%s151 + $0x10] sm:$0xff]
      %v257 = vld [vmem:[%s151 + $0x18] sm:$0xff]
      %v258 = vstv %s253
      %v259 = vsub.s32 %v254, %v258
      %v260 = vsub.s32 %v255, %v258
      %v261 = vsub.s32 %v256, %v258
      %v262 = vsub.s32 %v257, %v258
      %v263 = vlaneseq
      %v264 = vshrl.u32 %v263, 7
      %v265 = vadd.s32 %v264, 8
      %v266 = vadd.s32 %v264, 16
      %v267 = vadd.s32 %v264, 24
      %v268 = vadd.s32 %v264, 32
      %v269 = vadd.s32 %v264, 40
      %v270 = vadd.s32 %v264, 48
      %v271 = vadd.s32 %v264, 56
      %v272 = vadd.s32 %v264, 64
      %v273 = vadd.s32 %v264, 72
      %v274 = vadd.s32 %v264, 80
      %v275 = vadd.s32 %v264, 88
      %v276 = vadd.s32 %v264, 96
      %v277 = vadd.s32 %v264, 104
      %v278 = vadd.s32 %v264, 112
      %v279 = vadd.s32 %v264, 120
      %v280 = vadd.s32 %v264, 128
      %v281 = vadd.s32 %v264, 136
      %v282 = vadd.s32 %v264, 144
      %v283 = vadd.s32 %v264, 152
      %v284 = vadd.s32 %v264, 160
      %v285 = vadd.s32 %v264, 168
      %v286 = vadd.s32 %v264, 176
      %v287 = vadd.s32 %v264, 184
      %v288 = vadd.s32 %v264, 192
      %v289 = vadd.s32 %v264, 200
      %v290 = vadd.s32 %v264, 208
      %v291 = vadd.s32 %v264, 216
      %v292 = vadd.s32 %v264, 224
      %v293 = vadd.s32 %v264, 232
      %v294 = vadd.s32 %v264, 240
      %v295 = vadd.s32 %v264, 248
      %v296 = vadd.s32 %v264, 256
      %v297 = vadd.s32 %v264, 264
      %v298 = vadd.s32 %v264, 272
      %v299 = vadd.s32 %v264, 280
      %v300 = vadd.s32 %v264, 288
      %v301 = vadd.s32 %v264, 296
      %v302 = vadd.s32 %v264, 304
      %v303 = vadd.s32 %v264, 312
      %v304 = vadd.s32 %v264, 320
      %v305 = vadd.s32 %v264, 328
      %v306 = vadd.s32 %v264, 336
      %v307 = vadd.s32 %v264, 344
      %v308 = vadd.s32 %v264, 352
      %v309 = vadd.s32 %v264, 360
      %v310 = vadd.s32 %v264, 368
      %v311 = vadd.s32 %v264, 376
      %v312 = vadd.s32 %v264, 384
      %v313 = vadd.s32 %v264, 392
      %v314 = vadd.s32 %v264, 400
      %v315 = vadd.s32 %v264, 408
      %v316 = vadd.s32 %v264, 416
      %v317 = vadd.s32 %v264, 424
      %v318 = vadd.s32 %v264, 432
      %v319 = vadd.s32 %v264, 440
      %v320 = vadd.s32 %v264, 448
      %v321 = vadd.s32 %v264, 456
      %v322 = vadd.s32 %v264, 464
      %v323 = vadd.s32 %v264, 472
      %v324 = vadd.s32 %v264, 480
      %v325 = vadd.s32 %v264, 488
      %v326 = vadd.s32 %v264, 496
      %v327 = vadd.s32 %v264, 504
      %v328 = vadd.s32 %v264, 512
      %v329 = vlaneseq
      %v330 = vshrl.u32 %v329, 7
      %v331 = vsub.s32 0, %v330
      %v332 = vrot.slane %v259, %v331
      %v333 = vlaneseq
      %v334 = vshrl.u32 %v333, 7
      %v335 = vsub.s32 0, %v334
      %v336 = vrot.slane %v260, %v335
      %v337 = vlaneseq
      %v338 = vshrl.u32 %v337, 7
      %v339 = vsub.s32 0, %v338
      %v340 = vrot.slane %v261, %v339
      %v341 = vlaneseq
      %v342 = vshrl.u32 %v341, 7
      %v343 = vsub.s32 0, %v342
      %v344 = vrot.slane %v262, %v343
      %vm345 = vcmp.eq.s32.totalorder %v264, %v332
      %vm346 = vcmp.eq.s32.totalorder %v264, %v336
      %vm347 = vcmp.eq.s32.totalorder %v264, %v340
      %vm348 = vcmp.eq.s32.totalorder %v264, %v344
      %vm349 = vcmp.eq.s32.totalorder %v265, %v332
      %vm350 = vcmp.eq.s32.totalorder %v265, %v336
      %vm351 = vcmp.eq.s32.totalorder %v265, %v340
      %vm352 = vcmp.eq.s32.totalorder %v265, %v344
      %vm353 = vcmp.eq.s32.totalorder %v266, %v332
      %vm354 = vcmp.eq.s32.totalorder %v266, %v336
      %vm355 = vcmp.eq.s32.totalorder %v266, %v340
      %vm356 = vcmp.eq.s32.totalorder %v266, %v344
      %vm357 = vcmp.eq.s32.totalorder %v267, %v332
      %vm358 = vcmp.eq.s32.totalorder %v267, %v336
      %vm359 = vcmp.eq.s32.totalorder %v267, %v340
      %vm360 = vcmp.eq.s32.totalorder %v267, %v344
      %vm361 = vcmp.eq.s32.totalorder %v268, %v332
      %vm362 = vcmp.eq.s32.totalorder %v268, %v336
      %vm363 = vcmp.eq.s32.totalorder %v268, %v340
      %vm364 = vcmp.eq.s32.totalorder %v268, %v344
      %vm365 = vcmp.eq.s32.totalorder %v269, %v332
      %vm366 = vcmp.eq.s32.totalorder %v269, %v336
      %vm367 = vcmp.eq.s32.totalorder %v269, %v340
      %vm368 = vcmp.eq.s32.totalorder %v269, %v344
      %vm369 = vcmp.eq.s32.totalorder %v270, %v332
      %vm370 = vcmp.eq.s32.totalorder %v270, %v336
      %vm371 = vcmp.eq.s32.totalorder %v270, %v340
      %vm372 = vcmp.eq.s32.totalorder %v270, %v344
      %vm373 = vcmp.eq.s32.totalorder %v271, %v332
      %vm374 = vcmp.eq.s32.totalorder %v271, %v336
      %vm375 = vcmp.eq.s32.totalorder %v271, %v340
      %vm376 = vcmp.eq.s32.totalorder %v271, %v344
      %vm377 = vcmp.eq.s32.totalorder %v272, %v332
      %vm378 = vcmp.eq.s32.totalorder %v272, %v336
      %vm379 = vcmp.eq.s32.totalorder %v272, %v340
      %vm380 = vcmp.eq.s32.totalorder %v272, %v344
      %vm381 = vcmp.eq.s32.totalorder %v273, %v332
      %vm382 = vcmp.eq.s32.totalorder %v273, %v336
      %vm383 = vcmp.eq.s32.totalorder %v273, %v340
      %vm384 = vcmp.eq.s32.totalorder %v273, %v344
      %vm385 = vcmp.eq.s32.totalorder %v274, %v332
      %vm386 = vcmp.eq.s32.totalorder %v274, %v336
      %vm387 = vcmp.eq.s32.totalorder %v274, %v340
      %vm388 = vcmp.eq.s32.totalorder %v274, %v344
      %vm389 = vcmp.eq.s32.totalorder %v275, %v332
      %vm390 = vcmp.eq.s32.totalorder %v275, %v336
      %vm391 = vcmp.eq.s32.totalorder %v275, %v340
      %vm392 = vcmp.eq.s32.totalorder %v275, %v344
      %vm393 = vcmp.eq.s32.totalorder %v276, %v332
      %vm394 = vcmp.eq.s32.totalorder %v276, %v336
      %vm395 = vcmp.eq.s32.totalorder %v276, %v340
      %vm396 = vcmp.eq.s32.totalorder %v276, %v344
      %vm397 = vcmp.eq.s32.totalorder %v277, %v332
      %vm398 = vcmp.eq.s32.totalorder %v277, %v336
      %vm399 = vcmp.eq.s32.totalorder %v277, %v340
      %vm400 = vcmp.eq.s32.totalorder %v277, %v344
      %vm401 = vcmp.eq.s32.totalorder %v278, %v332
      %vm402 = vcmp.eq.s32.totalorder %v278, %v336
      %vm403 = vcmp.eq.s32.totalorder %v278, %v340
      %vm404 = vcmp.eq.s32.totalorder %v278, %v344
      %vm405 = vcmp.eq.s32.totalorder %v279, %v332
      %vm406 = vcmp.eq.s32.totalorder %v279, %v336
      %vm407 = vcmp.eq.s32.totalorder %v279, %v340
      %vm408 = vcmp.eq.s32.totalorder %v279, %v344
      %vm409 = vcmp.eq.s32.totalorder %v280, %v332
      %vm410 = vcmp.eq.s32.totalorder %v280, %v336
      %vm411 = vcmp.eq.s32.totalorder %v280, %v340
      %vm412 = vcmp.eq.s32.totalorder %v280, %v344
      %vm413 = vcmp.eq.s32.totalorder %v281, %v332
      %vm414 = vcmp.eq.s32.totalorder %v281, %v336
      %vm415 = vcmp.eq.s32.totalorder %v281, %v340
      %vm416 = vcmp.eq.s32.totalorder %v281, %v344
      %vm417 = vcmp.eq.s32.totalorder %v282, %v332
      %vm418 = vcmp.eq.s32.totalorder %v282, %v336
      %vm419 = vcmp.eq.s32.totalorder %v282, %v340
      %vm420 = vcmp.eq.s32.totalorder %v282, %v344
      %vm421 = vcmp.eq.s32.totalorder %v283, %v332
      %vm422 = vcmp.eq.s32.totalorder %v283, %v336
      %vm423 = vcmp.eq.s32.totalorder %v283, %v340
      %vm424 = vcmp.eq.s32.totalorder %v283, %v344
      %vm425 = vcmp.eq.s32.totalorder %v284, %v332
      %vm426 = vcmp.eq.s32.totalorder %v284, %v336
      %vm427 = vcmp.eq.s32.totalorder %v284, %v340
      %vm428 = vcmp.eq.s32.totalorder %v284, %v344
      %vm429 = vcmp.eq.s32.totalorder %v285, %v332
      %vm430 = vcmp.eq.s32.totalorder %v285, %v336
      %vm431 = vcmp.eq.s32.totalorder %v285, %v340
      %vm432 = vcmp.eq.s32.totalorder %v285, %v344
      %vm433 = vcmp.eq.s32.totalorder %v286, %v332
      %vm434 = vcmp.eq.s32.totalorder %v286, %v336
      %vm435 = vcmp.eq.s32.totalorder %v286, %v340
      %vm436 = vcmp.eq.s32.totalorder %v286, %v344
      %vm437 = vcmp.eq.s32.totalorder %v287, %v332
      %vm438 = vcmp.eq.s32.totalorder %v287, %v336
      %vm439 = vcmp.eq.s32.totalorder %v287, %v340
      %vm440 = vcmp.eq.s32.totalorder %v287, %v344
      %vm441 = vcmp.eq.s32.totalorder %v288, %v332
      %vm442 = vcmp.eq.s32.totalorder %v288, %v336
      %vm443 = vcmp.eq.s32.totalorder %v288, %v340
      %vm444 = vcmp.eq.s32.totalorder %v288, %v344
      %vm445 = vcmp.eq.s32.totalorder %v289, %v332
      %vm446 = vcmp.eq.s32.totalorder %v289, %v336
      %vm447 = vcmp.eq.s32.totalorder %v289, %v340
      %vm448 = vcmp.eq.s32.totalorder %v289, %v344
      %vm449 = vcmp.eq.s32.totalorder %v290, %v332
      %vm450 = vcmp.eq.s32.totalorder %v290, %v336
      %vm451 = vcmp.eq.s32.totalorder %v290, %v340
      %vm452 = vcmp.eq.s32.totalorder %v290, %v344
      %vm453 = vcmp.eq.s32.totalorder %v291, %v332
      %vm454 = vcmp.eq.s32.totalorder %v291, %v336
      %vm455 = vcmp.eq.s32.totalorder %v291, %v340
      %vm456 = vcmp.eq.s32.totalorder %v291, %v344
      %vm457 = vcmp.eq.s32.totalorder %v292, %v332
      %vm458 = vcmp.eq.s32.totalorder %v292, %v336
      %vm459 = vcmp.eq.s32.totalorder %v292, %v340
      %vm460 = vcmp.eq.s32.totalorder %v292, %v344
      %vm461 = vcmp.eq.s32.totalorder %v293, %v332
      %vm462 = vcmp.eq.s32.totalorder %v293, %v336
      %vm463 = vcmp.eq.s32.totalorder %v293, %v340
      %vm464 = vcmp.eq.s32.totalorder %v293, %v344
      %vm465 = vcmp.eq.s32.totalorder %v294, %v332
      %vm466 = vcmp.eq.s32.totalorder %v294, %v336
      %vm467 = vcmp.eq.s32.totalorder %v294, %v340
      %vm468 = vcmp.eq.s32.totalorder %v294, %v344
      %vm469 = vcmp.eq.s32.totalorder %v295, %v332
      %vm470 = vcmp.eq.s32.totalorder %v295, %v336
      %vm471 = vcmp.eq.s32.totalorder %v295, %v340
      %vm472 = vcmp.eq.s32.totalorder %v295, %v344
      %vm473 = vcmp.eq.s32.totalorder %v296, %v332
      %vm474 = vcmp.eq.s32.totalorder %v296, %v336
      %vm475 = vcmp.eq.s32.totalorder %v296, %v340
      %vm476 = vcmp.eq.s32.totalorder %v296, %v344
      %vm477 = vcmp.eq.s32.totalorder %v297, %v332
      %vm478 = vcmp.eq.s32.totalorder %v297, %v336
      %vm479 = vcmp.eq.s32.totalorder %v297, %v340
      %vm480 = vcmp.eq.s32.totalorder %v297, %v344
      %vm481 = vcmp.eq.s32.totalorder %v298, %v332
      %vm482 = vcmp.eq.s32.totalorder %v298, %v336
      %vm483 = vcmp.eq.s32.totalorder %v298, %v340
      %vm484 = vcmp.eq.s32.totalorder %v298, %v344
      %vm485 = vcmp.eq.s32.totalorder %v299, %v332
      %vm486 = vcmp.eq.s32.totalorder %v299, %v336
      %vm487 = vcmp.eq.s32.totalorder %v299, %v340
      %vm488 = vcmp.eq.s32.totalorder %v299, %v344
      %vm489 = vcmp.eq.s32.totalorder %v300, %v332
      %vm490 = vcmp.eq.s32.totalorder %v300, %v336
      %vm491 = vcmp.eq.s32.totalorder %v300, %v340
      %vm492 = vcmp.eq.s32.totalorder %v300, %v344
      %vm493 = vcmp.eq.s32.totalorder %v301, %v332
      %vm494 = vcmp.eq.s32.totalorder %v301, %v336
      %vm495 = vcmp.eq.s32.totalorder %v301, %v340
      %vm496 = vcmp.eq.s32.totalorder %v301, %v344
      %vm497 = vcmp.eq.s32.totalorder %v302, %v332
      %vm498 = vcmp.eq.s32.totalorder %v302, %v336
      %vm499 = vcmp.eq.s32.totalorder %v302, %v340
      %vm500 = vcmp.eq.s32.totalorder %v302, %v344
      %vm501 = vcmp.eq.s32.totalorder %v303, %v332
      %vm502 = vcmp.eq.s32.totalorder %v303, %v336
      %vm503 = vcmp.eq.s32.totalorder %v303, %v340
      %vm504 = vcmp.eq.s32.totalorder %v303, %v344
      %vm505 = vcmp.eq.s32.totalorder %v304, %v332
      %vm506 = vcmp.eq.s32.totalorder %v304, %v336
      %vm507 = vcmp.eq.s32.totalorder %v304, %v340
      %vm508 = vcmp.eq.s32.totalorder %v304, %v344
      %vm509 = vcmp.eq.s32.totalorder %v305, %v332
      %vm510 = vcmp.eq.s32.totalorder %v305, %v336
      %vm511 = vcmp.eq.s32.totalorder %v305, %v340
      %vm512 = vcmp.eq.s32.totalorder %v305, %v344
      %vm513 = vcmp.eq.s32.totalorder %v306, %v332
      %vm514 = vcmp.eq.s32.totalorder %v306, %v336
      %vm515 = vcmp.eq.s32.totalorder %v306, %v340
      %vm516 = vcmp.eq.s32.totalorder %v306, %v344
      %vm517 = vcmp.eq.s32.totalorder %v307, %v332
      %vm518 = vcmp.eq.s32.totalorder %v307, %v336
      %vm519 = vcmp.eq.s32.totalorder %v307, %v340
      %vm520 = vcmp.eq.s32.totalorder %v307, %v344
      %vm521 = vcmp.eq.s32.totalorder %v308, %v332
      %vm522 = vcmp.eq.s32.totalorder %v308, %v336
      %vm523 = vcmp.eq.s32.totalorder %v308, %v340
      %vm524 = vcmp.eq.s32.totalorder %v308, %v344
      %vm525 = vcmp.eq.s32.totalorder %v309, %v332
      %vm526 = vcmp.eq.s32.totalorder %v309, %v336
      %vm527 = vcmp.eq.s32.totalorder %v309, %v340
      %vm528 = vcmp.eq.s32.totalorder %v309, %v344
      %vm529 = vcmp.eq.s32.totalorder %v310, %v332
      %vm530 = vcmp.eq.s32.totalorder %v310, %v336
      %vm531 = vcmp.eq.s32.totalorder %v310, %v340
      %vm532 = vcmp.eq.s32.totalorder %v310, %v344
      %vm533 = vcmp.eq.s32.totalorder %v311, %v332
      %vm534 = vcmp.eq.s32.totalorder %v311, %v336
      %vm535 = vcmp.eq.s32.totalorder %v311, %v340
      %vm536 = vcmp.eq.s32.totalorder %v311, %v344
      %vm537 = vcmp.eq.s32.totalorder %v312, %v332
      %vm538 = vcmp.eq.s32.totalorder %v312, %v336
      %vm539 = vcmp.eq.s32.totalorder %v312, %v340
      %vm540 = vcmp.eq.s32.totalorder %v312, %v344
      %vm541 = vcmp.eq.s32.totalorder %v313, %v332
      %vm542 = vcmp.eq.s32.totalorder %v313, %v336
      %vm543 = vcmp.eq.s32.totalorder %v313, %v340
      %vm544 = vcmp.eq.s32.totalorder %v313, %v344
      %vm545 = vcmp.eq.s32.totalorder %v314, %v332
      %vm546 = vcmp.eq.s32.totalorder %v314, %v336
      %vm547 = vcmp.eq.s32.totalorder %v314, %v340
      %vm548 = vcmp.eq.s32.totalorder %v314, %v344
      %vm549 = vcmp.eq.s32.totalorder %v315, %v332
      %vm550 = vcmp.eq.s32.totalorder %v315, %v336
      %vm551 = vcmp.eq.s32.totalorder %v315, %v340
      %vm552 = vcmp.eq.s32.totalorder %v315, %v344
      %vm553 = vcmp.eq.s32.totalorder %v316, %v332
      %vm554 = vcmp.eq.s32.totalorder %v316, %v336
      %vm555 = vcmp.eq.s32.totalorder %v316, %v340
      %vm556 = vcmp.eq.s32.totalorder %v316, %v344
      %vm557 = vcmp.eq.s32.totalorder %v317, %v332
      %vm558 = vcmp.eq.s32.totalorder %v317, %v336
      %vm559 = vcmp.eq.s32.totalorder %v317, %v340
      %vm560 = vcmp.eq.s32.totalorder %v317, %v344
      %vm561 = vcmp.eq.s32.totalorder %v318, %v332
      %vm562 = vcmp.eq.s32.totalorder %v318, %v336
      %vm563 = vcmp.eq.s32.totalorder %v318, %v340
      %vm564 = vcmp.eq.s32.totalorder %v318, %v344
      %vm565 = vcmp.eq.s32.totalorder %v319, %v332
      %vm566 = vcmp.eq.s32.totalorder %v319, %v336
      %vm567 = vcmp.eq.s32.totalorder %v319, %v340
      %vm568 = vcmp.eq.s32.totalorder %v319, %v344
      %vm569 = vcmp.eq.s32.totalorder %v320, %v332
      %vm570 = vcmp.eq.s32.totalorder %v320, %v336
      %vm571 = vcmp.eq.s32.totalorder %v320, %v340
      %vm572 = vcmp.eq.s32.totalorder %v320, %v344
      %vm573 = vcmp.eq.s32.totalorder %v321, %v332
      %vm574 = vcmp.eq.s32.totalorder %v321, %v336
      %vm575 = vcmp.eq.s32.totalorder %v321, %v340
      %vm576 = vcmp.eq.s32.totalorder %v321, %v344
      %vm577 = vcmp.eq.s32.totalorder %v322, %v332
      %vm578 = vcmp.eq.s32.totalorder %v322, %v336
      %vm579 = vcmp.eq.s32.totalorder %v322, %v340
      %vm580 = vcmp.eq.s32.totalorder %v322, %v344
      %vm581 = vcmp.eq.s32.totalorder %v323, %v332
      %vm582 = vcmp.eq.s32.totalorder %v323, %v336
      %vm583 = vcmp.eq.s32.totalorder %v323, %v340
      %vm584 = vcmp.eq.s32.totalorder %v323, %v344
      %vm585 = vcmp.eq.s32.totalorder %v324, %v332
      %vm586 = vcmp.eq.s32.totalorder %v324, %v336
      %vm587 = vcmp.eq.s32.totalorder %v324, %v340
      %vm588 = vcmp.eq.s32.totalorder %v324, %v344
      %vm589 = vcmp.eq.s32.totalorder %v325, %v332
      %vm590 = vcmp.eq.s32.totalorder %v325, %v336
      %vm591 = vcmp.eq.s32.totalorder %v325, %v340
      %vm592 = vcmp.eq.s32.totalorder %v325, %v344
      %vm593 = vcmp.eq.s32.totalorder %v326, %v332
      %vm594 = vcmp.eq.s32.totalorder %v326, %v336
      %vm595 = vcmp.eq.s32.totalorder %v326, %v340
      %vm596 = vcmp.eq.s32.totalorder %v326, %v344
      %vm597 = vcmp.eq.s32.totalorder %v327, %v332
      %vm598 = vcmp.eq.s32.totalorder %v327, %v336
      %vm599 = vcmp.eq.s32.totalorder %v327, %v340
      %vm600 = vcmp.eq.s32.totalorder %v327, %v344
      %vm601 = vcmp.eq.s32.totalorder %v328, %v332
      %vm602 = vcmp.eq.s32.totalorder %v328, %v336
      %vm603 = vcmp.eq.s32.totalorder %v328, %v340
      %vm604 = vcmp.eq.s32.totalorder %v328, %v344
      %v605 = vsel %vm345, 1, 0
      %v606 = vsel %vm346, 1, 0
      %v607 = vsel %vm347, 1, 0
      %v608 = vsel %vm348, 1, 0
      %v609 = vsel %vm349, 1, 0
      %v610 = vsel %vm350, 1, 0
      %v611 = vsel %vm351, 1, 0
      %v612 = vsel %vm352, 1, 0
      %v613 = vsel %vm353, 1, 0
      %v614 = vsel %vm354, 1, 0
      %v615 = vsel %vm355, 1, 0
      %v616 = vsel %vm356, 1, 0
      %v617 = vsel %vm357, 1, 0
      %v618 = vsel %vm358, 1, 0
      %v619 = vsel %vm359, 1, 0
      %v620 = vsel %vm360, 1, 0
      %v621 = vsel %vm361, 1, 0
      %v622 = vsel %vm362, 1, 0
      %v623 = vsel %vm363, 1, 0
      %v624 = vsel %vm364, 1, 0
      %v625 = vsel %vm365, 1, 0
      %v626 = vsel %vm366, 1, 0
      %v627 = vsel %vm367, 1, 0
      %v628 = vsel %vm368, 1, 0
      %v629 = vsel %vm369, 1, 0
      %v630 = vsel %vm370, 1, 0
      %v631 = vsel %vm371, 1, 0
      %v632 = vsel %vm372, 1, 0
      %v633 = vsel %vm373, 1, 0
      %v634 = vsel %vm374, 1, 0
      %v635 = vsel %vm375, 1, 0
      %v636 = vsel %vm376, 1, 0
      %v637 = vsel %vm377, 1, 0
      %v638 = vsel %vm378, 1, 0
      %v639 = vsel %vm379, 1, 0
      %v640 = vsel %vm380, 1, 0
      %v641 = vsel %vm381, 1, 0
      %v642 = vsel %vm382, 1, 0
      %v643 = vsel %vm383, 1, 0
      %v644 = vsel %vm384, 1, 0
      %v645 = vsel %vm385, 1, 0
      %v646 = vsel %vm386, 1, 0
      %v647 = vsel %vm387, 1, 0
      %v648 = vsel %vm388, 1, 0
      %v649 = vsel %vm389, 1, 0
      %v650 = vsel %vm390, 1, 0
      %v651 = vsel %vm391, 1, 0
      %v652 = vsel %vm392, 1, 0
      %v653 = vsel %vm393, 1, 0
      %v654 = vsel %vm394, 1, 0
      %v655 = vsel %vm395, 1, 0
      %v656 = vsel %vm396, 1, 0
      %v657 = vsel %vm397, 1, 0
      %v658 = vsel %vm398, 1, 0
      %v659 = vsel %vm399, 1, 0
      %v660 = vsel %vm400, 1, 0
      %v661 = vsel %vm401, 1, 0
      %v662 = vsel %vm402, 1, 0
      %v663 = vsel %vm403, 1, 0
      %v664 = vsel %vm404, 1, 0
      %v665 = vsel %vm405, 1, 0
      %v666 = vsel %vm406, 1, 0
      %v667 = vsel %vm407, 1, 0
      %v668 = vsel %vm408, 1, 0
      %v669 = vsel %vm409, 1, 0
      %v670 = vsel %vm410, 1, 0
      %v671 = vsel %vm411, 1, 0
      %v672 = vsel %vm412, 1, 0
      %v673 = vsel %vm413, 1, 0
      %v674 = vsel %vm414, 1, 0
      %v675 = vsel %vm415, 1, 0
      %v676 = vsel %vm416, 1, 0
      %v677 = vsel %vm417, 1, 0
      %v678 = vsel %vm418, 1, 0
      %v679 = vsel %vm419, 1, 0
      %v680 = vsel %vm420, 1, 0
      %v681 = vsel %vm421, 1, 0
      %v682 = vsel %vm422, 1, 0
      %v683 = vsel %vm423, 1, 0
      %v684 = vsel %vm424, 1, 0
      %v685 = vsel %vm425, 1, 0
      %v686 = vsel %vm426, 1, 0
      %v687 = vsel %vm427, 1, 0
      %v688 = vsel %vm428, 1, 0
      %v689 = vsel %vm429, 1, 0
      %v690 = vsel %vm430, 1, 0
      %v691 = vsel %vm431, 1, 0
      %v692 = vsel %vm432, 1, 0
      %v693 = vsel %vm433, 1, 0
      %v694 = vsel %vm434, 1, 0
      %v695 = vsel %vm435, 1, 0
      %v696 = vsel %vm436, 1, 0
      %v697 = vsel %vm437, 1, 0
      %v698 = vsel %vm438, 1, 0
      %v699 = vsel %vm439, 1, 0
      %v700 = vsel %vm440, 1, 0
      %v701 = vsel %vm441, 1, 0
      %v702 = vsel %vm442, 1, 0
      %v703 = vsel %vm443, 1, 0
      %v704 = vsel %vm444, 1, 0
      %v705 = vsel %vm445, 1, 0
      %v706 = vsel %vm446, 1, 0
      %v707 = vsel %vm447, 1, 0
      %v708 = vsel %vm448, 1, 0
      %v709 = vsel %vm449, 1, 0
      %v710 = vsel %vm450, 1, 0
      %v711 = vsel %vm451, 1, 0
      %v712 = vsel %vm452, 1, 0
      %v713 = vsel %vm453, 1, 0
      %v714 = vsel %vm454, 1, 0
      %v715 = vsel %vm455, 1, 0
      %v716 = vsel %vm456, 1, 0
      %v717 = vsel %vm457, 1, 0
      %v718 = vsel %vm458, 1, 0
      %v719 = vsel %vm459, 1, 0
      %v720 = vsel %vm460, 1, 0
      %v721 = vsel %vm461, 1, 0
      %v722 = vsel %vm462, 1, 0
      %v723 = vsel %vm463, 1, 0
      %v724 = vsel %vm464, 1, 0
      %v725 = vsel %vm465, 1, 0
      %v726 = vsel %vm466, 1, 0
      %v727 = vsel %vm467, 1, 0
      %v728 = vsel %vm468, 1, 0
      %v729 = vsel %vm469, 1, 0
      %v730 = vsel %vm470, 1, 0
      %v731 = vsel %vm471, 1, 0
      %v732 = vsel %vm472, 1, 0
      %v733 = vsel %vm473, 1, 0
      %v734 = vsel %vm474, 1, 0
      %v735 = vsel %vm475, 1, 0
      %v736 = vsel %vm476, 1, 0
      %v737 = vsel %vm477, 1, 0
      %v738 = vsel %vm478, 1, 0
      %v739 = vsel %vm479, 1, 0
      %v740 = vsel %vm480, 1, 0
      %v741 = vsel %vm481, 1, 0
      %v742 = vsel %vm482, 1, 0
      %v743 = vsel %vm483, 1, 0
      %v744 = vsel %vm484, 1, 0
      %v745 = vsel %vm485, 1, 0
      %v746 = vsel %vm486, 1, 0
      %v747 = vsel %vm487, 1, 0
      %v748 = vsel %vm488, 1, 0
      %v749 = vsel %vm489, 1, 0
      %v750 = vsel %vm490, 1, 0
      %v751 = vsel %vm491, 1, 0
      %v752 = vsel %vm492, 1, 0
      %v753 = vsel %vm493, 1, 0
      %v754 = vsel %vm494, 1, 0
      %v755 = vsel %vm495, 1, 0
      %v756 = vsel %vm496, 1, 0
      %v757 = vsel %vm497, 1, 0
      %v758 = vsel %vm498, 1, 0
      %v759 = vsel %vm499, 1, 0
      %v760 = vsel %vm500, 1, 0
      %v761 = vsel %vm501, 1, 0
      %v762 = vsel %vm502, 1, 0
      %v763 = vsel %vm503, 1, 0
      %v764 = vsel %vm504, 1, 0
      %v765 = vsel %vm505, 1, 0
      %v766 = vsel %vm506, 1, 0
      %v767 = vsel %vm507, 1, 0
      %v768 = vsel %vm508, 1, 0
      %v769 = vsel %vm509, 1, 0
      %v770 = vsel %vm510, 1, 0
      %v771 = vsel %vm511, 1, 0
      %v772 = vsel %vm512, 1, 0
      %v773 = vsel %vm513, 1, 0
      %v774 = vsel %vm514, 1, 0
      %v775 = vsel %vm515, 1, 0
      %v776 = vsel %vm516, 1, 0
      %v777 = vsel %vm517, 1, 0
      %v778 = vsel %vm518, 1, 0
      %v779 = vsel %vm519, 1, 0
      %v780 = vsel %vm520, 1, 0
      %v781 = vsel %vm521, 1, 0
      %v782 = vsel %vm522, 1, 0
      %v783 = vsel %vm523, 1, 0
      %v784 = vsel %vm524, 1, 0
      %v785 = vsel %vm525, 1, 0
      %v786 = vsel %vm526, 1, 0
      %v787 = vsel %vm527, 1, 0
      %v788 = vsel %vm528, 1, 0
      %v789 = vsel %vm529, 1, 0
      %v790 = vsel %vm530, 1, 0
      %v791 = vsel %vm531, 1, 0
      %v792 = vsel %vm532, 1, 0
      %v793 = vsel %vm533, 1, 0
      %v794 = vsel %vm534, 1, 0
      %v795 = vsel %vm535, 1, 0
      %v796 = vsel %vm536, 1, 0
      %v797 = vsel %vm537, 1, 0
      %v798 = vsel %vm538, 1, 0
      %v799 = vsel %vm539, 1, 0
      %v800 = vsel %vm540, 1, 0
      %v801 = vsel %vm541, 1, 0
      %v802 = vsel %vm542, 1, 0
      %v803 = vsel %vm543, 1, 0
      %v804 = vsel %vm544, 1, 0
      %v805 = vsel %vm545, 1, 0
      %v806 = vsel %vm546, 1, 0
      %v807 = vsel %vm547, 1, 0
      %v808 = vsel %vm548, 1, 0
      %v809 = vsel %vm549, 1, 0
      %v810 = vsel %vm550, 1, 0
      %v811 = vsel %vm551, 1, 0
      %v812 = vsel %vm552, 1, 0
      %v813 = vsel %vm553, 1, 0
      %v814 = vsel %vm554, 1, 0
      %v815 = vsel %vm555, 1, 0
      %v816 = vsel %vm556, 1, 0
      %v817 = vsel %vm557, 1, 0
      %v818 = vsel %vm558, 1, 0
      %v819 = vsel %vm559, 1, 0
      %v820 = vsel %vm560, 1, 0
      %v821 = vsel %vm561, 1, 0
      %v822 = vsel %vm562, 1, 0
      %v823 = vsel %vm563, 1, 0
      %v824 = vsel %vm564, 1, 0
      %v825 = vsel %vm565, 1, 0
      %v826 = vsel %vm566, 1, 0
      %v827 = vsel %vm567, 1, 0
      %v828 = vsel %vm568, 1, 0
      %v829 = vsel %vm569, 1, 0
      %v830 = vsel %vm570, 1, 0
      %v831 = vsel %vm571, 1, 0
      %v832 = vsel %vm572, 1, 0
      %v833 = vsel %vm573, 1, 0
      %v834 = vsel %vm574, 1, 0
      %v835 = vsel %vm575, 1, 0
      %v836 = vsel %vm576, 1, 0
      %v837 = vsel %vm577, 1, 0
      %v838 = vsel %vm578, 1, 0
      %v839 = vsel %vm579, 1, 0
      %v840 = vsel %vm580, 1, 0
      %v841 = vsel %vm581, 1, 0
      %v842 = vsel %vm582, 1, 0
      %v843 = vsel %vm583, 1, 0
      %v844 = vsel %vm584, 1, 0
      %v845 = vsel %vm585, 1, 0
      %v846 = vsel %vm586, 1, 0
      %v847 = vsel %vm587, 1, 0
      %v848 = vsel %vm588, 1, 0
      %v849 = vsel %vm589, 1, 0
      %v850 = vsel %vm590, 1, 0
      %v851 = vsel %vm591, 1, 0
      %v852 = vsel %vm592, 1, 0
      %v853 = vsel %vm593, 1, 0
      %v854 = vsel %vm594, 1, 0
      %v855 = vsel %vm595, 1, 0
      %v856 = vsel %vm596, 1, 0
      %v857 = vsel %vm597, 1, 0
      %v858 = vsel %vm598, 1, 0
      %v859 = vsel %vm599, 1, 0
      %v860 = vsel %vm600, 1, 0
      %v861 = vsel %vm601, 1, 0
      %v862 = vsel %vm602, 1, 0
      %v863 = vsel %vm603, 1, 0
      %v864 = vsel %vm604, 1, 0
      %v865 = vcvt.s32.f32 %v605
      %v866 = vcvt.s32.f32 %v606
      %v867 = vcvt.s32.f32 %v607
      %v868 = vcvt.s32.f32 %v608
      %v869 = vcvt.s32.f32 %v609
      %v870 = vcvt.s32.f32 %v610
      %v871 = vcvt.s32.f32 %v611
      %v872 = vcvt.s32.f32 %v612
      %v873 = vcvt.s32.f32 %v613
      %v874 = vcvt.s32.f32 %v614
      %v875 = vcvt.s32.f32 %v615
      %v876 = vcvt.s32.f32 %v616
      %v877 = vcvt.s32.f32 %v617
      %v878 = vcvt.s32.f32 %v618
      %v879 = vcvt.s32.f32 %v619
      %v880 = vcvt.s32.f32 %v620
      %v881 = vcvt.s32.f32 %v621
      %v882 = vcvt.s32.f32 %v622
      %v883 = vcvt.s32.f32 %v623
      %v884 = vcvt.s32.f32 %v624
      %v885 = vcvt.s32.f32 %v625
      %v886 = vcvt.s32.f32 %v626
      %v887 = vcvt.s32.f32 %v627
      %v888 = vcvt.s32.f32 %v628
      %v889 = vcvt.s32.f32 %v629
      %v890 = vcvt.s32.f32 %v630
      %v891 = vcvt.s32.f32 %v631
      %v892 = vcvt.s32.f32 %v632
      %v893 = vcvt.s32.f32 %v633
      %v894 = vcvt.s32.f32 %v634
      %v895 = vcvt.s32.f32 %v635
      %v896 = vcvt.s32.f32 %v636
      %v897 = vcvt.s32.f32 %v637
      %v898 = vcvt.s32.f32 %v638
      %v899 = vcvt.s32.f32 %v639
      %v900 = vcvt.s32.f32 %v640
      %v901 = vcvt.s32.f32 %v641
      %v902 = vcvt.s32.f32 %v642
      %v903 = vcvt.s32.f32 %v643
      %v904 = vcvt.s32.f32 %v644
      %v905 = vcvt.s32.f32 %v645
      %v906 = vcvt.s32.f32 %v646
      %v907 = vcvt.s32.f32 %v647
      %v908 = vcvt.s32.f32 %v648
      %v909 = vcvt.s32.f32 %v649
      %v910 = vcvt.s32.f32 %v650
      %v911 = vcvt.s32.f32 %v651
      %v912 = vcvt.s32.f32 %v652
      %v913 = vcvt.s32.f32 %v653
      %v914 = vcvt.s32.f32 %v654
      %v915 = vcvt.s32.f32 %v655
      %v916 = vcvt.s32.f32 %v656
      %v917 = vcvt.s32.f32 %v657
      %v918 = vcvt.s32.f32 %v658
      %v919 = vcvt.s32.f32 %v659
      %v920 = vcvt.s32.f32 %v660
      %v921 = vcvt.s32.f32 %v661
      %v922 = vcvt.s32.f32 %v662
      %v923 = vcvt.s32.f32 %v663
      %v924 = vcvt.s32.f32 %v664
      %v925 = vcvt.s32.f32 %v665
      %v926 = vcvt.s32.f32 %v666
      %v927 = vcvt.s32.f32 %v667
      %v928 = vcvt.s32.f32 %v668
      %v929 = vcvt.s32.f32 %v669
      %v930 = vcvt.s32.f32 %v670
      %v931 = vcvt.s32.f32 %v671
      %v932 = vcvt.s32.f32 %v672
      %v933 = vcvt.s32.f32 %v673
      %v934 = vcvt.s32.f32 %v674
      %v935 = vcvt.s32.f32 %v675
      %v936 = vcvt.s32.f32 %v676
      %v937 = vcvt.s32.f32 %v677
      %v938 = vcvt.s32.f32 %v678
      %v939 = vcvt.s32.f32 %v679
      %v940 = vcvt.s32.f32 %v680
      %v941 = vcvt.s32.f32 %v681
      %v942 = vcvt.s32.f32 %v682
      %v943 = vcvt.s32.f32 %v683
      %v944 = vcvt.s32.f32 %v684
      %v945 = vcvt.s32.f32 %v685
      %v946 = vcvt.s32.f32 %v686
      %v947 = vcvt.s32.f32 %v687
      %v948 = vcvt.s32.f32 %v688
      %v949 = vcvt.s32.f32 %v689
      %v950 = vcvt.s32.f32 %v690
      %v951 = vcvt.s32.f32 %v691
      %v952 = vcvt.s32.f32 %v692
      %v953 = vcvt.s32.f32 %v693
      %v954 = vcvt.s32.f32 %v694
      %v955 = vcvt.s32.f32 %v695
      %v956 = vcvt.s32.f32 %v696
      %v957 = vcvt.s32.f32 %v697
      %v958 = vcvt.s32.f32 %v698
      %v959 = vcvt.s32.f32 %v699
      %v960 = vcvt.s32.f32 %v700
      %v961 = vcvt.s32.f32 %v701
      %v962 = vcvt.s32.f32 %v702
      %v963 = vcvt.s32.f32 %v703
      %v964 = vcvt.s32.f32 %v704
      %v965 = vcvt.s32.f32 %v705
      %v966 = vcvt.s32.f32 %v706
      %v967 = vcvt.s32.f32 %v707
      %v968 = vcvt.s32.f32 %v708
      %v969 = vcvt.s32.f32 %v709
      %v970 = vcvt.s32.f32 %v710
      %v971 = vcvt.s32.f32 %v711
      %v972 = vcvt.s32.f32 %v712
      %v973 = vcvt.s32.f32 %v713
      %v974 = vcvt.s32.f32 %v714
      %v975 = vcvt.s32.f32 %v715
      %v976 = vcvt.s32.f32 %v716
      %v977 = vcvt.s32.f32 %v717
      %v978 = vcvt.s32.f32 %v718
      %v979 = vcvt.s32.f32 %v719
      %v980 = vcvt.s32.f32 %v720
      %v981 = vcvt.s32.f32 %v721
      %v982 = vcvt.s32.f32 %v722
      %v983 = vcvt.s32.f32 %v723
      %v984 = vcvt.s32.f32 %v724
      %v985 = vcvt.s32.f32 %v725
      %v986 = vcvt.s32.f32 %v726
      %v987 = vcvt.s32.f32 %v727
      %v988 = vcvt.s32.f32 %v728
      %v989 = vcvt.s32.f32 %v729
      %v990 = vcvt.s32.f32 %v730
      %v991 = vcvt.s32.f32 %v731
      %v992 = vcvt.s32.f32 %v732
      %v993 = vcvt.s32.f32 %v733
      %v994 = vcvt.s32.f32 %v734
      %v995 = vcvt.s32.f32 %v735
      %v996 = vcvt.s32.f32 %v736
      %v997 = vcvt.s32.f32 %v737
      %v998 = vcvt.s32.f32 %v738
      %v999 = vcvt.s32.f32 %v739
      %v1000 = vcvt.s32.f32 %v740
      %v1001 = vcvt.s32.f32 %v741
      %v1002 = vcvt.s32.f32 %v742
      %v1003 = vcvt.s32.f32 %v743
      %v1004 = vcvt.s32.f32 %v744
      %v1005 = vcvt.s32.f32 %v745
      %v1006 = vcvt.s32.f32 %v746
      %v1007 = vcvt.s32.f32 %v747
      %v1008 = vcvt.s32.f32 %v748
      %v1009 = vcvt.s32.f32 %v749
      %v1010 = vcvt.s32.f32 %v750
      %v1011 = vcvt.s32.f32 %v751
      %v1012 = vcvt.s32.f32 %v752
      %v1013 = vcvt.s32.f32 %v753
      %v1014 = vcvt.s32.f32 %v754
      %v1015 = vcvt.s32.f32 %v755
      %v1016 = vcvt.s32.f32 %v756
      %v1017 = vcvt.s32.f32 %v757
      %v1018 = vcvt.s32.f32 %v758
      %v1019 = vcvt.s32.f32 %v759
      %v1020 = vcvt.s32.f32 %v760
      %v1021 = vcvt.s32.f32 %v761
      %v1022 = vcvt.s32.f32 %v762
      %v1023 = vcvt.s32.f32 %v763
      %v1024 = vcvt.s32.f32 %v764
      %v1025 = vcvt.s32.f32 %v765
      %v1026 = vcvt.s32.f32 %v766
      %v1027 = vcvt.s32.f32 %v767
      %v1028 = vcvt.s32.f32 %v768
      %v1029 = vcvt.s32.f32 %v769
      %v1030 = vcvt.s32.f32 %v770
      %v1031 = vcvt.s32.f32 %v771
      %v1032 = vcvt.s32.f32 %v772
      %v1033 = vcvt.s32.f32 %v773
      %v1034 = vcvt.s32.f32 %v774
      %v1035 = vcvt.s32.f32 %v775
      %v1036 = vcvt.s32.f32 %v776
      %v1037 = vcvt.s32.f32 %v777
      %v1038 = vcvt.s32.f32 %v778
      %v1039 = vcvt.s32.f32 %v779
      %v1040 = vcvt.s32.f32 %v780
      %v1041 = vcvt.s32.f32 %v781
      %v1042 = vcvt.s32.f32 %v782
      %v1043 = vcvt.s32.f32 %v783
      %v1044 = vcvt.s32.f32 %v784
      %v1045 = vcvt.s32.f32 %v785
      %v1046 = vcvt.s32.f32 %v786
      %v1047 = vcvt.s32.f32 %v787
      %v1048 = vcvt.s32.f32 %v788
      %v1049 = vcvt.s32.f32 %v789
      %v1050 = vcvt.s32.f32 %v790
      %v1051 = vcvt.s32.f32 %v791
      %v1052 = vcvt.s32.f32 %v792
      %v1053 = vcvt.s32.f32 %v793
      %v1054 = vcvt.s32.f32 %v794
      %v1055 = vcvt.s32.f32 %v795
      %v1056 = vcvt.s32.f32 %v796
      %v1057 = vcvt.s32.f32 %v797
      %v1058 = vcvt.s32.f32 %v798
      %v1059 = vcvt.s32.f32 %v799
      %v1060 = vcvt.s32.f32 %v800
      %v1061 = vcvt.s32.f32 %v801
      %v1062 = vcvt.s32.f32 %v802
      %v1063 = vcvt.s32.f32 %v803
      %v1064 = vcvt.s32.f32 %v804
      %v1065 = vcvt.s32.f32 %v805
      %v1066 = vcvt.s32.f32 %v806
      %v1067 = vcvt.s32.f32 %v807
      %v1068 = vcvt.s32.f32 %v808
      %v1069 = vcvt.s32.f32 %v809
      %v1070 = vcvt.s32.f32 %v810
      %v1071 = vcvt.s32.f32 %v811
      %v1072 = vcvt.s32.f32 %v812
      %v1073 = vcvt.s32.f32 %v813
      %v1074 = vcvt.s32.f32 %v814
      %v1075 = vcvt.s32.f32 %v815
      %v1076 = vcvt.s32.f32 %v816
      %v1077 = vcvt.s32.f32 %v817
      %v1078 = vcvt.s32.f32 %v818
      %v1079 = vcvt.s32.f32 %v819
      %v1080 = vcvt.s32.f32 %v820
      %v1081 = vcvt.s32.f32 %v821
      %v1082 = vcvt.s32.f32 %v822
      %v1083 = vcvt.s32.f32 %v823
      %v1084 = vcvt.s32.f32 %v824
      %v1085 = vcvt.s32.f32 %v825
      %v1086 = vcvt.s32.f32 %v826
      %v1087 = vcvt.s32.f32 %v827
      %v1088 = vcvt.s32.f32 %v828
      %v1089 = vcvt.s32.f32 %v829
      %v1090 = vcvt.s32.f32 %v830
      %v1091 = vcvt.s32.f32 %v831
      %v1092 = vcvt.s32.f32 %v832
      %v1093 = vcvt.s32.f32 %v833
      %v1094 = vcvt.s32.f32 %v834
      %v1095 = vcvt.s32.f32 %v835
      %v1096 = vcvt.s32.f32 %v836
      %v1097 = vcvt.s32.f32 %v837
      %v1098 = vcvt.s32.f32 %v838
      %v1099 = vcvt.s32.f32 %v839
      %v1100 = vcvt.s32.f32 %v840
      %v1101 = vcvt.s32.f32 %v841
      %v1102 = vcvt.s32.f32 %v842
      %v1103 = vcvt.s32.f32 %v843
      %v1104 = vcvt.s32.f32 %v844
      %v1105 = vcvt.s32.f32 %v845
      %v1106 = vcvt.s32.f32 %v846
      %v1107 = vcvt.s32.f32 %v847
      %v1108 = vcvt.s32.f32 %v848
      %v1109 = vcvt.s32.f32 %v849
      %v1110 = vcvt.s32.f32 %v850
      %v1111 = vcvt.s32.f32 %v851
      %v1112 = vcvt.s32.f32 %v852
      %v1113 = vcvt.s32.f32 %v853
      %v1114 = vcvt.s32.f32 %v854
      %v1115 = vcvt.s32.f32 %v855
      %v1116 = vcvt.s32.f32 %v856
      %v1117 = vcvt.s32.f32 %v857
      %v1118 = vcvt.s32.f32 %v858
      %v1119 = vcvt.s32.f32 %v859
      %v1120 = vcvt.s32.f32 %v860
      %v1121 = vcvt.s32.f32 %v861
      %v1122 = vcvt.s32.f32 %v862
      %v1123 = vcvt.s32.f32 %v863
      %v1124 = vcvt.s32.f32 %v864
      %v1125 = vld [vmem:[%s156] sm:$0xff]
      %v1126 = vld [vmem:[%s156 + $0x8] sm:$0xff]
      %v1127 = vld [vmem:[%s156 + $0x10] sm:$0xff]
      %v1128 = vld [vmem:[%s156 + $0x18] sm:$0xff]
      %v1129 = vld [vmem:[%s156 + $0x20] sm:$0xff]
      %v1130 = vld [vmem:[%s156 + $0x28] sm:$0xff]
      %v1131 = vld [vmem:[%s156 + $0x30] sm:$0xff]
      %v1132 = vld [vmem:[%s156 + $0x38] sm:$0xff]
      %v1133 = vld [vmem:[%s156 + $0x40] sm:$0xff]
      %v1134 = vld [vmem:[%s156 + $0x48] sm:$0xff]
      %v1135 = vld [vmem:[%s156 + $0x50] sm:$0xff]
      %v1136 = vld [vmem:[%s156 + $0x58] sm:$0xff]
      %v1137 = vld [vmem:[%s156 + $0x60] sm:$0xff]
      %v1138 = vld [vmem:[%s156 + $0x68] sm:$0xff]
      %v1139 = vld [vmem:[%s156 + $0x70] sm:$0xff]
      %v1140 = vld [vmem:[%s156 + $0x78] sm:$0xff]
      %v1141 = vld [vmem:[%s156 + $0x80] sm:$0xff]
      %v1142 = vld [vmem:[%s156 + $0x88] sm:$0xff]
      %v1143 = vld [vmem:[%s156 + $0x90] sm:$0xff]
      %v1144 = vld [vmem:[%s156 + $0x98] sm:$0xff]
      %v1145 = vld [vmem:[%s156 + $0xa0] sm:$0xff]
      %v1146 = vld [vmem:[%s156 + $0xa8] sm:$0xff]
      %v1147 = vld [vmem:[%s156 + $0xb0] sm:$0xff]
      %v1148 = vld [vmem:[%s156 + $0xb8] sm:$0xff]
      %v1149 = vld [vmem:[%s156 + $0xc0] sm:$0xff]
      %v1150 = vld [vmem:[%s156 + $0xc8] sm:$0xff]
      %v1151 = vld [vmem:[%s156 + $0xd0] sm:$0xff]
      %v1152 = vld [vmem:[%s156 + $0xd8] sm:$0xff]
      %v1153 = vld [vmem:[%s156 + $0xe0] sm:$0xff]
      %v1154 = vld [vmem:[%s156 + $0xe8] sm:$0xff]
      %v1155 = vld [vmem:[%s156 + $0xf0] sm:$0xff]
      %v1156 = vld [vmem:[%s156 + $0xf8] sm:$0xff]
      %v1157 = vld [vmem:[%s156 + $0x100] sm:$0xff]
      %v1158 = vld [vmem:[%s156 + $0x108] sm:$0xff]
      %v1159 = vld [vmem:[%s156 + $0x110] sm:$0xff]
      %v1160 = vld [vmem:[%s156 + $0x118] sm:$0xff]
      %v1161 = vld [vmem:[%s156 + $0x120] sm:$0xff]
      %v1162 = vld [vmem:[%s156 + $0x128] sm:$0xff]
      %v1163 = vld [vmem:[%s156 + $0x130] sm:$0xff]
      %v1164 = vld [vmem:[%s156 + $0x138] sm:$0xff]
      %v1165 = vld [vmem:[%s156 + $0x140] sm:$0xff]
      %v1166 = vld [vmem:[%s156 + $0x148] sm:$0xff]
      %v1167 = vld [vmem:[%s156 + $0x150] sm:$0xff]
      %v1168 = vld [vmem:[%s156 + $0x158] sm:$0xff]
      %v1169 = vld [vmem:[%s156 + $0x160] sm:$0xff]
      %v1170 = vld [vmem:[%s156 + $0x168] sm:$0xff]
      %v1171 = vld [vmem:[%s156 + $0x170] sm:$0xff]
      %v1172 = vld [vmem:[%s156 + $0x178] sm:$0xff]
      %v1173 = vld [vmem:[%s156 + $0x180] sm:$0xff]
      %v1174 = vld [vmem:[%s156 + $0x188] sm:$0xff]
      %v1175 = vld [vmem:[%s156 + $0x190] sm:$0xff]
      %v1176 = vld [vmem:[%s156 + $0x198] sm:$0xff]
      %v1177 = vld [vmem:[%s156 + $0x1a0] sm:$0xff]
      %v1178 = vld [vmem:[%s156 + $0x1a8] sm:$0xff]
      %v1179 = vld [vmem:[%s156 + $0x1b0] sm:$0xff]
      %v1180 = vld [vmem:[%s156 + $0x1b8] sm:$0xff]
      %v1181 = vld [vmem:[%s156 + $0x1c0] sm:$0xff]
      %v1182 = vld [vmem:[%s156 + $0x1c8] sm:$0xff]
      %v1183 = vld [vmem:[%s156 + $0x1d0] sm:$0xff]
      %v1184 = vld [vmem:[%s156 + $0x1d8] sm:$0xff]
      %v1185 = vld [vmem:[%s156 + $0x1e0] sm:$0xff]
      %v1186 = vld [vmem:[%s156 + $0x1e8] sm:$0xff]
      %v1187 = vld [vmem:[%s156 + $0x1f0] sm:$0xff]
      %v1188 = vld [vmem:[%s156 + $0x1f8] sm:$0xff]
      %1189 = vmatprep.subr.mxu0 0.0
      %1190 = vmatpush1.msra.mxu0 %v1125
      %1191 = vmatprep.subr.mxu0 0.0
      %1192 = vmatpush1.msra.mxu0 %v1126
      %1193 = vmatprep.subr.mxu0 0.0
      %1194 = vmatpush1.msra.mxu0 %v1127
      %1195 = vmatprep.subr.mxu0 0.0
      %1196 = vmatpush1.msra.mxu0 %v1128
      %1197 = vmatprep.subr.mxu0 0.0
      %1198 = vmatpush1.msra.mxu0 %v1129
      %1199 = vmatprep.subr.mxu0 0.0
      %1200 = vmatpush1.msra.mxu0 %v1130
      %1201 = vmatprep.subr.mxu0 0.0
      %1202 = vmatpush1.msra.mxu0 %v1131
      %1203 = vmatprep.subr.mxu0 0.0
      %1204 = vmatpush1.msra.mxu0 %v1132
      %1205 = vmatprep.subr.mxu0 0.0
      %1206 = vmatpush1.msra.mxu0 %v1133
      %1207 = vmatprep.subr.mxu0 0.0
      %1208 = vmatpush1.msra.mxu0 %v1134
      %1209 = vmatprep.subr.mxu0 0.0
      %1210 = vmatpush1.msra.mxu0 %v1135
      %1211 = vmatprep.subr.mxu0 0.0
      %1212 = vmatpush1.msra.mxu0 %v1136
      %1213 = vmatprep.subr.mxu0 0.0
      %1214 = vmatpush1.msra.mxu0 %v1137
      %1215 = vmatprep.subr.mxu0 0.0
      %1216 = vmatpush1.msra.mxu0 %v1138
      %1217 = vmatprep.subr.mxu0 0.0
      %1218 = vmatpush1.msra.mxu0 %v1139
      %1219 = vmatprep.subr.mxu0 0.0
      %1220 = vmatpush1.msra.mxu0 %v1140
      %1221 = vmatprep.subr.mxu0 0.0
      %1222 = vmatpush1.msra.mxu0 %v1141
      %1223 = vmatprep.subr.mxu0 0.0
      %1224 = vmatpush1.msra.mxu0 %v1142
      %1225 = vmatprep.subr.mxu0 0.0
      %1226 = vmatpush1.msra.mxu0 %v1143
      %1227 = vmatprep.subr.mxu0 0.0
      %1228 = vmatpush1.msra.mxu0 %v1144
      %1229 = vmatprep.subr.mxu0 0.0
      %1230 = vmatpush1.msra.mxu0 %v1145
      %1231 = vmatprep.subr.mxu0 0.0
      %1232 = vmatpush1.msra.mxu0 %v1146
      %1233 = vmatprep.subr.mxu0 0.0
      %1234 = vmatpush1.msra.mxu0 %v1147
      %1235 = vmatprep.subr.mxu0 0.0
      %1236 = vmatpush1.msra.mxu0 %v1148
      %1237 = vmatprep.subr.mxu0 0.0
      %1238 = vmatpush1.msra.mxu0 %v1149
      %1239 = vmatprep.subr.mxu0 0.0
      %1240 = vmatpush1.msra.mxu0 %v1150
      %1241 = vmatprep.subr.mxu0 0.0
      %1242 = vmatpush1.msra.mxu0 %v1151
      %1243 = vmatprep.subr.mxu0 0.0
      %1244 = vmatpush1.msra.mxu0 %v1152
      %1245 = vmatprep.subr.mxu0 0.0
      %1246 = vmatpush1.msra.mxu0 %v1153
      %1247 = vmatprep.subr.mxu0 0.0
      %1248 = vmatpush1.msra.mxu0 %v1154
      %1249 = vmatprep.subr.mxu0 0.0
      %1250 = vmatpush1.msra.mxu0 %v1155
      %1251 = vmatprep.subr.mxu0 0.0
      %1252 = vmatpush1.msra.mxu0 %v1156
      %1253 = vmatprep.mubr.f32.mxu0 %v866
      %1254 = vmatmul.mubr.f32.gmra.mrb[0].mxu0 %v865
      %v1255 = vpop.f32.mrb[0].mxu0
      %v1256 = vadd.f32 0.0, %v1255
      %v1257 = vpop.f32.mrb[0].mxu0
      %1258 = vmatprep.mubr.f32.mxu0 %v870
      %1259 = vmatmul.mubr.f32.gmra.mrb[0].mxu0 %v869
      %v1260 = vpop.f32.mrb[0].mxu0
      %v1261 = vadd.f32 0.0, %v1260
      %v1262 = vpop.f32.mrb[0].mxu0
      %1263 = vmatprep.mubr.f32.mxu0 %v874
      %1264 = vmatmul.mubr.f32.gmra.mrb[0].mxu0 %v873
      %v1265 = vpop.f32.mrb[0].mxu0
      %v1266 = vadd.f32 0.0, %v1265
      %v1267 = vpop.f32.mrb[0].mxu0
      %1268 = vmatprep.mubr.f32.mxu0 %v878
      %1269 = vmatmul.mubr.f32.gmra.mrb[0].mxu0 %v877
      %v1270 = vpop.f32.mrb[0].mxu0
      %v1271 = vadd.f32 0.0, %v1270
      %v1272 = vpop.f32.mrb[0].mxu0
      %1273 = vmatprep.mubr.f32.mxu0 %v882
      %1274 = vmatmul.mubr.f32.gmra.mrb[0].mxu0 %v881
      %v1275 = vpop.f32.mrb[0].mxu0
      %v1276 = vadd.f32 0.0, %v1275
      %v1277 = vpop.f32.mrb[0].mxu0
      %1278 = vmatprep.mubr.f32.mxu0 %v886
      %1279 = vmatmul.mubr.f32.gmra.mrb[0].mxu0 %v885
      %v1280 = vpop.f32.mrb[0].mxu0
      %v1281 = vadd.f32 0.0, %v1280
      %v1282 = vpop.f32.mrb[0].mxu0
      %1283 = vmatprep.mubr.f32.mxu0 %v890
      %1284 = vmatmul.mubr.f32.gmra.mrb[0].mxu0 %v889
      %v1285 = vpop.f32.mrb[0].mxu0
      %v1286 = vadd.f32 0.0, %v1285
      %v1287 = vpop.f32.mrb[0].mxu0
      %1288 = vmatprep.mubr.f32.mxu0 %v894
      %1289 = vmatmul.mubr.f32.gmra.mrb[0].mxu0 %v893
      %v1290 = vpop.f32.mrb[0].mxu0
      %v1291 = vadd.f32 0.0, %v1290
      %v1292 = vpop.f32.mrb[0].mxu0
      %1293 = vmatprep.mubr.f32.mxu0 %v898
      %1294 = vmatmul.mubr.f32.gmra.mrb[0].mxu0 %v897
      %v1295 = vpop.f32.mrb[0].mxu0
      %v1296 = vadd.f32 0.0, %v1295
      %v1297 = vpop.f32.mrb[0].mxu0
      %1298 = vmatprep.mubr.f32.mxu0 %v902
      %1299 = vmatmul.mubr.f32.gmra.mrb[0].mxu0 %v901
      %v1300 = vpop.f32.mrb[0].mxu0
      %v1301 = vadd.f32 0.0, %v1300
      %v1302 = vpop.f32.mrb[0].mxu0
      %1303 = vmatprep.mubr.f32.mxu0 %v906
      %1304 = vmatmul.mubr.f32.gmra.mrb[0].mxu0 %v905
      %v1305 = vpop.f32.mrb[0].mxu0
      %v1306 = vadd.f32 0.0, %v1305
      %v1307 = vpop.f32.mrb[0].mxu0
      %1308 = vmatprep.mubr.f32.mxu0 %v910
      %1309 = vmatmul.mubr.f32.gmra.mrb[0].mxu0 %v909
      %v1310 = vpop.f32.mrb[0].mxu0
      %v1311 = vadd.f32 0.0, %v1310
      %v1312 = vpop.f32.mrb[0].mxu0
      %1313 = vmatprep.mubr.f32.mxu0 %v914
      %1314 = vmatmul.mubr.f32.gmra.mrb[0].mxu0 %v913
      %v1315 = vpop.f32.mrb[0].mxu0
      %v1316 = vadd.f32 0.0, %v1315
      %v1317 = vpop.f32.mrb[0].mxu0
      %1318 = vmatprep.mubr.f32.mxu0 %v918
      %1319 = vmatmul.mubr.f32.gmra.mrb[0].mxu0 %v917
      %v1320 = vpop.f32.mrb[0].mxu0
      %v1321 = vadd.f32 0.0, %v1320
      %v1322 = vpop.f32.mrb[0].mxu0
      %1323 = vmatprep.mubr.f32.mxu0 %v922
      %1324 = vmatmul.mubr.f32.gmra.mrb[0].mxu0 %v921
      %v1325 = vpop.f32.mrb[0].mxu0
      %v1326 = vadd.f32 0.0, %v1325
      %v1327 = vpop.f32.mrb[0].mxu0
      %1328 = vmatprep.mubr.f32.mxu0 %v926
      %1329 = vmatmul.mubr.f32.gmra.mrb[0].mxu0 %v925
      %v1330 = vpop.f32.mrb[0].mxu0
      %v1331 = vadd.f32 0.0, %v1330
      %v1332 = vpop.f32.mrb[0].mxu0
      %1333 = vmatprep.mubr.f32.mxu0 %v930
      %1334 = vmatmul.mubr.f32.gmra.mrb[0].mxu0 %v929
      %v1335 = vpop.f32.mrb[0].mxu0
      %v1336 = vadd.f32 0.0, %v1335
      %v1337 = vpop.f32.mrb[0].mxu0
      %1338 = vmatprep.mubr.f32.mxu0 %v934
      %1339 = vmatmul.mubr.f32.gmra.mrb[0].mxu0 %v933
      %v1340 = vpop.f32.mrb[0].mxu0
      %v1341 = vadd.f32 0.0, %v1340
      %v1342 = vpop.f32.mrb[0].mxu0
      %1343 = vmatprep.mubr.f32.mxu0 %v938
      %1344 = vmatmul.mubr.f32.gmra.mrb[0].mxu0 %v937
      %v1345 = vpop.f32.mrb[0].mxu0
      %v1346 = vadd.f32 0.0, %v1345
      %v1347 = vpop.f32.mrb[0].mxu0
      %1348 = vmatprep.mubr.f32.mxu0 %v942
      %1349 = vmatmul.mubr.f32.gmra.mrb[0].mxu0 %v941
      %v1350 = vpop.f32.mrb[0].mxu0
      %v1351 = vadd.f32 0.0, %v1350
      %v1352 = vpop.f32.mrb[0].mxu0
      %1353 = vmatprep.mubr.f32.mxu0 %v946
      %1354 = vmatmul.mubr.f32.gmra.mrb[0].mxu0 %v945
      %v1355 = vpop.f32.mrb[0].mxu0
      %v1356 = vadd.f32 0.0, %v1355
      %v1357 = vpop.f32.mrb[0].mxu0
      %1358 = vmatprep.mubr.f32.mxu0 %v950
      %1359 = vmatmul.mubr.f32.gmra.mrb[0].mxu0 %v949
      %v1360 = vpop.f32.mrb[0].mxu0
      %v1361 = vadd.f32 0.0, %v1360
      %v1362 = vpop.f32.mrb[0].mxu0
      %1363 = vmatprep.mubr.f32.mxu0 %v954
      %1364 = vmatmul.mubr.f32.gmra.mrb[0].mxu0 %v953
      %v1365 = vpop.f32.mrb[0].mxu0
      %v1366 = vadd.f32 0.0, %v1365
      %v1367 = vpop.f32.mrb[0].mxu0
      %1368 = vmatprep.mubr.f32.mxu0 %v958
      %1369 = vmatmul.mubr.f32.gmra.mrb[0].mxu0 %v957
      %v1370 = vpop.f32.mrb[0].mxu0
      %v1371 = vadd.f32 0.0, %v1370
      %v1372 = vpop.f32.mrb[0].mxu0
      %1373 = vmatprep.mubr.f32.mxu0 %v962
      %1374 = vmatmul.mubr.f32.gmra.mrb[0].mxu0 %v961
      %v1375 = vpop.f32.mrb[0].mxu0
      %v1376 = vadd.f32 0.0, %v1375
      %v1377 = vpop.f32.mrb[0].mxu0
      %1378 = vmatprep.mubr.f32.mxu0 %v966
      %1379 = vmatmul.mubr.f32.gmra.mrb[0].mxu0 %v965
      %v1380 = vpop.f32.mrb[0].mxu0
      %v1381 = vadd.f32 0.0, %v1380
      %v1382 = vpop.f32.mrb[0].mxu0
      %1383 = vmatprep.mubr.f32.mxu0 %v970
      %1384 = vmatmul.mubr.f32.gmra.mrb[0].mxu0 %v969
      %v1385 = vpop.f32.mrb[0].mxu0
      %v1386 = vadd.f32 0.0, %v1385
      %v1387 = vpop.f32.mrb[0].mxu0
      %1388 = vmatprep.mubr.f32.mxu0 %v974
      %1389 = vmatmul.mubr.f32.gmra.mrb[0].mxu0 %v973
      %v1390 = vpop.f32.mrb[0].mxu0
      %v1391 = vadd.f32 0.0, %v1390
      %v1392 = vpop.f32.mrb[0].mxu0
      %1393 = vmatprep.mubr.f32.mxu0 %v978
      %1394 = vmatmul.mubr.f32.gmra.mrb[0].mxu0 %v977
      %v1395 = vpop.f32.mrb[0].mxu0
      %v1396 = vadd.f32 0.0, %v1395
      %v1397 = vpop.f32.mrb[0].mxu0
      %1398 = vmatprep.mubr.f32.mxu0 %v982
      %1399 = vmatmul.mubr.f32.gmra.mrb[0].mxu0 %v981
      %v1400 = vpop.f32.mrb[0].mxu0
      %v1401 = vadd.f32 0.0, %v1400
      %v1402 = vpop.f32.mrb[0].mxu0
      %1403 = vmatprep.mubr.f32.mxu0 %v986
      %1404 = vmatmul.mubr.f32.gmra.mrb[0].mxu0 %v985
      %v1405 = vpop.f32.mrb[0].mxu0
      %v1406 = vadd.f32 0.0, %v1405
      %v1407 = vpop.f32.mrb[0].mxu0
      %1408 = vmatprep.mubr.f32.mxu0 %v990
      %1409 = vmatmul.mubr.f32.gmra.mrb[0].mxu0 %v989
      %v1410 = vpop.f32.mrb[0].mxu0
      %v1411 = vadd.f32 0.0, %v1410
      %v1412 = vpop.f32.mrb[0].mxu0
      %1413 = vmatprep.mubr.f32.mxu0 %v994
      %1414 = vmatmul.mubr.f32.gmra.mrb[0].mxu0 %v993
      %v1415 = vpop.f32.mrb[0].mxu0
      %v1416 = vadd.f32 0.0, %v1415
      %v1417 = vpop.f32.mrb[0].mxu0
      %1418 = vmatprep.mubr.f32.mxu0 %v998
      %1419 = vmatmul.mubr.f32.gmra.mrb[0].mxu0 %v997
      %v1420 = vpop.f32.mrb[0].mxu0
      %v1421 = vadd.f32 0.0, %v1420
      %v1422 = vpop.f32.mrb[0].mxu0
      %1423 = vmatprep.mubr.f32.mxu0 %v1002
      %1424 = vmatmul.mubr.f32.gmra.mrb[0].mxu0 %v1001
      %v1425 = vpop.f32.mrb[0].mxu0
      %v1426 = vadd.f32 0.0, %v1425
      %v1427 = vpop.f32.mrb[0].mxu0
      %1428 = vmatprep.mubr.f32.mxu0 %v1006
      %1429 = vmatmul.mubr.f32.gmra.mrb[0].mxu0 %v1005
      %v1430 = vpop.f32.mrb[0].mxu0
      %v1431 = vadd.f32 0.0, %v1430
      %v1432 = vpop.f32.mrb[0].mxu0
      %1433 = vmatprep.mubr.f32.mxu0 %v1010
      %1434 = vmatmul.mubr.f32.gmra.mrb[0].mxu0 %v1009
      %v1435 = vpop.f32.mrb[0].mxu0
      %v1436 = vadd.f32 0.0, %v1435
      %v1437 = vpop.f32.mrb[0].mxu0
      %1438 = vmatprep.mubr.f32.mxu0 %v1014
      %1439 = vmatmul.mubr.f32.gmra.mrb[0].mxu0 %v1013
      %v1440 = vpop.f32.mrb[0].mxu0
      %v1441 = vadd.f32 0.0, %v1440
      %v1442 = vpop.f32.mrb[0].mxu0
      %1443 = vmatprep.mubr.f32.mxu0 %v1018
      %1444 = vmatmul.mubr.f32.gmra.mrb[0].mxu0 %v1017
      %v1445 = vpop.f32.mrb[0].mxu0
      %v1446 = vadd.f32 0.0, %v1445
      %v1447 = vpop.f32.mrb[0].mxu0
      %1448 = vmatprep.mubr.f32.mxu0 %v1022
      %1449 = vmatmul.mubr.f32.gmra.mrb[0].mxu0 %v1021
      %v1450 = vpop.f32.mrb[0].mxu0
      %v1451 = vadd.f32 0.0, %v1450
      %v1452 = vpop.f32.mrb[0].mxu0
      %1453 = vmatprep.mubr.f32.mxu0 %v1026
      %1454 = vmatmul.mubr.f32.gmra.mrb[0].mxu0 %v1025
      %v1455 = vpop.f32.mrb[0].mxu0
      %v1456 = vadd.f32 0.0, %v1455
      %v1457 = vpop.f32.mrb[0].mxu0
      %1458 = vmatprep.mubr.f32.mxu0 %v1030
      %1459 = vmatmul.mubr.f32.gmra.mrb[0].mxu0 %v1029
      %v1460 = vpop.f32.mrb[0].mxu0
      %v1461 = vadd.f32 0.0, %v1460
      %v1462 = vpop.f32.mrb[0].mxu0
      %1463 = vmatprep.mubr.f32.mxu0 %v1034
      %1464 = vmatmul.mubr.f32.gmra.mrb[0].mxu0 %v1033
      %v1465 = vpop.f32.mrb[0].mxu0
      %v1466 = vadd.f32 0.0, %v1465
      %v1467 = vpop.f32.mrb[0].mxu0
      %1468 = vmatprep.mubr.f32.mxu0 %v1038
      %1469 = vmatmul.mubr.f32.gmra.mrb[0].mxu0 %v1037
      %v1470 = vpop.f32.mrb[0].mxu0
      %v1471 = vadd.f32 0.0, %v1470
      %v1472 = vpop.f32.mrb[0].mxu0
      %1473 = vmatprep.mubr.f32.mxu0 %v1042
      %1474 = vmatmul.mubr.f32.gmra.mrb[0].mxu0 %v1041
      %v1475 = vpop.f32.mrb[0].mxu0
      %v1476 = vadd.f32 0.0, %v1475
      %v1477 = vpop.f32.mrb[0].mxu0
      %1478 = vmatprep.mubr.f32.mxu0 %v1046
      %1479 = vmatmul.mubr.f32.gmra.mrb[0].mxu0 %v1045
      %v1480 = vpop.f32.mrb[0].mxu0
      %v1481 = vadd.f32 0.0, %v1480
      %v1482 = vpop.f32.mrb[0].mxu0
      %1483 = vmatprep.mubr.f32.mxu0 %v1050
      %1484 = vmatmul.mubr.f32.gmra.mrb[0].mxu0 %v1049
      %v1485 = vpop.f32.mrb[0].mxu0
      %v1486 = vadd.f32 0.0, %v1485
      %v1487 = vpop.f32.mrb[0].mxu0
      %1488 = vmatprep.mubr.f32.mxu0 %v1054
      %1489 = vmatmul.mubr.f32.gmra.mrb[0].mxu0 %v1053
      %v1490 = vpop.f32.mrb[0].mxu0
      %v1491 = vadd.f32 0.0, %v1490
      %v1492 = vpop.f32.mrb[0].mxu0
      %1493 = vmatprep.mubr.f32.mxu0 %v1058
      %1494 = vmatmul.mubr.f32.gmra.mrb[0].mxu0 %v1057
      %v1495 = vpop.f32.mrb[0].mxu0
      %v1496 = vadd.f32 0.0, %v1495
      %v1497 = vpop.f32.mrb[0].mxu0
      %1498 = vmatprep.mubr.f32.mxu0 %v1062
      %1499 = vmatmul.mubr.f32.gmra.mrb[0].mxu0 %v1061
      %v1500 = vpop.f32.mrb[0].mxu0
      %v1501 = vadd.f32 0.0, %v1500
      %v1502 = vpop.f32.mrb[0].mxu0
      %1503 = vmatprep.mubr.f32.mxu0 %v1066
      %1504 = vmatmul.mubr.f32.gmra.mrb[0].mxu0 %v1065
      %v1505 = vpop.f32.mrb[0].mxu0
      %v1506 = vadd.f32 0.0, %v1505
      %v1507 = vpop.f32.mrb[0].mxu0
      %1508 = vmatprep.mubr.f32.mxu0 %v1070
      %1509 = vmatmul.mubr.f32.gmra.mrb[0].mxu0 %v1069
      %v1510 = vpop.f32.mrb[0].mxu0
      %v1511 = vadd.f32 0.0, %v1510
      %v1512 = vpop.f32.mrb[0].mxu0
      %1513 = vmatprep.mubr.f32.mxu0 %v1074
      %1514 = vmatmul.mubr.f32.gmra.mrb[0].mxu0 %v1073
      %v1515 = vpop.f32.mrb[0].mxu0
      %v1516 = vadd.f32 0.0, %v1515
      %v1517 = vpop.f32.mrb[0].mxu0
      %1518 = vmatprep.mubr.f32.mxu0 %v1078
      %1519 = vmatmul.mubr.f32.gmra.mrb[0].mxu0 %v1077
      %v1520 = vpop.f32.mrb[0].mxu0
      %v1521 = vadd.f32 0.0, %v1520
      %v1522 = vpop.f32.mrb[0].mxu0
      %1523 = vmatprep.mubr.f32.mxu0 %v1082
      %1524 = vmatmul.mubr.f32.gmra.mrb[0].mxu0 %v1081
      %v1525 = vpop.f32.mrb[0].mxu0
      %v1526 = vadd.f32 0.0, %v1525
      %v1527 = vpop.f32.mrb[0].mxu0
      %1528 = vmatprep.mubr.f32.mxu0 %v1086
      %1529 = vmatmul.mubr.f32.gmra.mrb[0].mxu0 %v1085
      %v1530 = vpop.f32.mrb[0].mxu0
      %v1531 = vadd.f32 0.0, %v1530
      %v1532 = vpop.f32.mrb[0].mxu0
      %1533 = vmatprep.mubr.f32.mxu0 %v1090
      %1534 = vmatmul.mubr.f32.gmra.mrb[0].mxu0 %v1089
      %v1535 = vpop.f32.mrb[0].mxu0
      %v1536 = vadd.f32 0.0, %v1535
      %v1537 = vpop.f32.mrb[0].mxu0
      %1538 = vmatprep.mubr.f32.mxu0 %v1094
      %1539 = vmatmul.mubr.f32.gmra.mrb[0].mxu0 %v1093
      %v1540 = vpop.f32.mrb[0].mxu0
      %v1541 = vadd.f32 0.0, %v1540
      %v1542 = vpop.f32.mrb[0].mxu0
      %1543 = vmatprep.mubr.f32.mxu0 %v1098
      %1544 = vmatmul.mubr.f32.gmra.mrb[0].mxu0 %v1097
      %v1545 = vpop.f32.mrb[0].mxu0
      %v1546 = vadd.f32 0.0, %v1545
      %v1547 = vpop.f32.mrb[0].mxu0
      %1548 = vmatprep.mubr.f32.mxu0 %v1102
      %1549 = vmatmul.mubr.f32.gmra.mrb[0].mxu0 %v1101
      %v1550 = vpop.f32.mrb[0].mxu0
      %v1551 = vadd.f32 0.0, %v1550
      %v1552 = vpop.f32.mrb[0].mxu0
      %1553 = vmatprep.mubr.f32.mxu0 %v1106
      %1554 = vmatmul.mubr.f32.gmra.mrb[0].mxu0 %v1105
      %v1555 = vpop.f32.mrb[0].mxu0
      %v1556 = vadd.f32 0.0, %v1555
      %v1557 = vpop.f32.mrb[0].mxu0
      %1558 = vmatprep.mubr.f32.mxu0 %v1110
      %1559 = vmatmul.mubr.f32.gmra.mrb[0].mxu0 %v1109
      %v1560 = vpop.f32.mrb[0].mxu0
      %v1561 = vadd.f32 0.0, %v1560
      %v1562 = vpop.f32.mrb[0].mxu0
      %1563 = vmatprep.mubr.f32.mxu0 %v1114
      %1564 = vmatmul.mubr.f32.gmra.mrb[0].mxu0 %v1113
      %v1565 = vpop.f32.mrb[0].mxu0
      %v1566 = vadd.f32 0.0, %v1565
      %v1567 = vpop.f32.mrb[0].mxu0
      %1568 = vmatprep.mubr.f32.mxu0 %v1118
      %1569 = vmatmul.mubr.f32.gmra.mrb[0].mxu0 %v1117
      %v1570 = vpop.f32.mrb[0].mxu0
      %v1571 = vadd.f32 0.0, %v1570
      %v1572 = vpop.f32.mrb[0].mxu0
      %1573 = vmatprep.mubr.f32.mxu0 %v1122
      %1574 = vmatmul.mubr.f32.gmra.mrb[0].mxu0 %v1121
      %v1575 = vpop.f32.mrb[0].mxu0
      %v1576 = vadd.f32 0.0, %v1575
      %v1577 = vpop.f32.mrb[0].mxu0
      %1578 = vdwg.mxu0
      %1579 = vmatprep.subr.mxu0 0.0
      %1580 = vmatpush1.msra.mxu0 %v1157
      %1581 = vmatprep.subr.mxu0 0.0
      %1582 = vmatpush1.msra.mxu0 %v1158
      %1583 = vmatprep.subr.mxu0 0.0
      %1584 = vmatpush1.msra.mxu0 %v1159
      %1585 = vmatprep.subr.mxu0 0.0
      %1586 = vmatpush1.msra.mxu0 %v1160
      %1587 = vmatprep.subr.mxu0 0.0
      %1588 = vmatpush1.msra.mxu0 %v1161
      %1589 = vmatprep.subr.mxu0 0.0
      %1590 = vmatpush1.msra.mxu0 %v1162
      %1591 = vmatprep.subr.mxu0 0.0
      %1592 = vmatpush1.msra.mxu0 %v1163
      %1593 = vmatprep.subr.mxu0 0.0
      %1594 = vmatpush1.msra.mxu0 %v1164
      %1595 = vmatprep.subr.mxu0 0.0
      %1596 = vmatpush1.msra.mxu0 %v1165
      %1597 = vmatprep.subr.mxu0 0.0
      %1598 = vmatpush1.msra.mxu0 %v1166
      %1599 = vmatprep.subr.mxu0 0.0
      %1600 = vmatpush1.msra.mxu0 %v1167
      %1601 = vmatprep.subr.mxu0 0.0
      %1602 = vmatpush1.msra.mxu0 %v1168
      %1603 = vmatprep.subr.mxu0 0.0
      %1604 = vmatpush1.msra.mxu0 %v1169
      %1605 = vmatprep.subr.mxu0 0.0
      %1606 = vmatpush1.msra.mxu0 %v1170
      %1607 = vmatprep.subr.mxu0 0.0
      %1608 = vmatpush1.msra.mxu0 %v1171
      %1609 = vmatprep.subr.mxu0 0.0
      %1610 = vmatpush1.msra.mxu0 %v1172
      %1611 = vmatprep.subr.mxu0 0.0
      %1612 = vmatpush1.msra.mxu0 %v1173
      %1613 = vmatprep.subr.mxu0 0.0
      %1614 = vmatpush1.msra.mxu0 %v1174
      %1615 = vmatprep.subr.mxu0 0.0
      %1616 = vmatpush1.msra.mxu0 %v1175
      %1617 = vmatprep.subr.mxu0 0.0
      %1618 = vmatpush1.msra.mxu0 %v1176
      %1619 = vmatprep.subr.mxu0 0.0
      %1620 = vmatpush1.msra.mxu0 %v1177
      %1621 = vmatprep.subr.mxu0 0.0
      %1622 = vmatpush1.msra.mxu0 %v1178
      %1623 = vmatprep.subr.mxu0 0.0
      %1624 = vmatpush1.msra.mxu0 %v1179
      %1625 = vmatprep.subr.mxu0 0.0
      %1626 = vmatpush1.msra.mxu0 %v1180
      %1627 = vmatprep.subr.mxu0 0.0
      %1628 = vmatpush1.msra.mxu0 %v1181
      %1629 = vmatprep.subr.mxu0 0.0
      %1630 = vmatpush1.msra.mxu0 %v1182
      %1631 = vmatprep.subr.mxu0 0.0
      %1632 = vmatpush1.msra.mxu0 %v1183
      %1633 = vmatprep.subr.mxu0 0.0
      %1634 = vmatpush1.msra.mxu0 %v1184
      %1635 = vmatprep.subr.mxu0 0.0
      %1636 = vmatpush1.msra.mxu0 %v1185
      %1637 = vmatprep.subr.mxu0 0.0
      %1638 = vmatpush1.msra.mxu0 %v1186
      %1639 = vmatprep.subr.mxu0 0.0
      %1640 = vmatpush1.msra.mxu0 %v1187
      %1641 = vmatprep.subr.mxu0 0.0
      %1642 = vmatpush1.msra.mxu0 %v1188
      %1643 = vmatprep.mubr.f32.mxu0 %v868
      %1644 = vmatmul.mubr.f32.gmra.mrb[0].mxu0 %v867
      %v1645 = vpop.f32.mrb[0].mxu0
      %v1646 = vadd.f32 %v1256, %v1645
      %v1647 = vpop.f32.mrb[0].mxu0
      %1648 = vmatprep.mubr.f32.mxu0 %v872
      %1649 = vmatmul.mubr.f32.gmra.mrb[0].mxu0 %v871
      %v1650 = vpop.f32.mrb[0].mxu0
      %v1651 = vadd.f32 %v1261, %v1650
      %v1652 = vpop.f32.mrb[0].mxu0
      %1653 = vmatprep.mubr.f32.mxu0 %v876
      %1654 = vmatmul.mubr.f32.gmra.mrb[0].mxu0 %v875
      %v1655 = vpop.f32.mrb[0].mxu0
      %v1656 = vadd.f32 %v1266, %v1655
      %v1657 = vpop.f32.mrb[0].mxu0
      %1658 = vmatprep.mubr.f32.mxu0 %v880
      %1659 = vmatmul.mubr.f32.gmra.mrb[0].mxu0 %v879
      %v1660 = vpop.f32.mrb[0].mxu0
      %v1661 = vadd.f32 %v1271, %v1660
      %v1662 = vpop.f32.mrb[0].mxu0
      %1663 = vmatprep.mubr.f32.mxu0 %v884
      %1664 = vmatmul.mubr.f32.gmra.mrb[0].mxu0 %v883
      %v1665 = vpop.f32.mrb[0].mxu0
      %v1666 = vadd.f32 %v1276, %v1665
      %v1667 = vpop.f32.mrb[0].mxu0
      %1668 = vmatprep.mubr.f32.mxu0 %v888
      %1669 = vmatmul.mubr.f32.gmra.mrb[0].mxu0 %v887
      %v1670 = vpop.f32.mrb[0].mxu0
      %v1671 = vadd.f32 %v1281, %v1670
      %v1672 = vpop.f32.mrb[0].mxu0
      %1673 = vmatprep.mubr.f32.mxu0 %v892
      %1674 = vmatmul.mubr.f32.gmra.mrb[0].mxu0 %v891
      %v1675 = vpop.f32.mrb[0].mxu0
      %v1676 = vadd.f32 %v1286, %v1675
      %v1677 = vpop.f32.mrb[0].mxu0
      %1678 = vmatprep.mubr.f32.mxu0 %v896
      %1679 = vmatmul.mubr.f32.gmra.mrb[0].mxu0 %v895
      %v1680 = vpop.f32.mrb[0].mxu0
      %v1681 = vadd.f32 %v1291, %v1680
      %v1682 = vpop.f32.mrb[0].mxu0
      %1683 = vmatprep.mubr.f32.mxu0 %v900
      %1684 = vmatmul.mubr.f32.gmra.mrb[0].mxu0 %v899
      %v1685 = vpop.f32.mrb[0].mxu0
      %v1686 = vadd.f32 %v1296, %v1685
      %v1687 = vpop.f32.mrb[0].mxu0
      %1688 = vmatprep.mubr.f32.mxu0 %v904
      %1689 = vmatmul.mubr.f32.gmra.mrb[0].mxu0 %v903
      %v1690 = vpop.f32.mrb[0].mxu0
      %v1691 = vadd.f32 %v1301, %v1690
      %v1692 = vpop.f32.mrb[0].mxu0
      %1693 = vmatprep.mubr.f32.mxu0 %v908
      %1694 = vmatmul.mubr.f32.gmra.mrb[0].mxu0 %v907
      %v1695 = vpop.f32.mrb[0].mxu0
      %v1696 = vadd.f32 %v1306, %v1695
      %v1697 = vpop.f32.mrb[0].mxu0
      %1698 = vmatprep.mubr.f32.mxu0 %v912
      %1699 = vmatmul.mubr.f32.gmra.mrb[0].mxu0 %v911
      %v1700 = vpop.f32.mrb[0].mxu0
      %v1701 = vadd.f32 %v1311, %v1700
      %v1702 = vpop.f32.mrb[0].mxu0
      %1703 = vmatprep.mubr.f32.mxu0 %v916
      %1704 = vmatmul.mubr.f32.gmra.mrb[0].mxu0 %v915
      %v1705 = vpop.f32.mrb[0].mxu0
      %v1706 = vadd.f32 %v1316, %v1705
      %v1707 = vpop.f32.mrb[0].mxu0
      %1708 = vmatprep.mubr.f32.mxu0 %v920
      %1709 = vmatmul.mubr.f32.gmra.mrb[0].mxu0 %v919
      %v1710 = vpop.f32.mrb[0].mxu0
      %v1711 = vadd.f32 %v1321, %v1710
      %v1712 = vpop.f32.mrb[0].mxu0
      %1713 = vmatprep.mubr.f32.mxu0 %v924
      %1714 = vmatmul.mubr.f32.gmra.mrb[0].mxu0 %v923
      %v1715 = vpop.f32.mrb[0].mxu0
      %v1716 = vadd.f32 %v1326, %v1715
      %v1717 = vpop.f32.mrb[0].mxu0
      %1718 = vmatprep.mubr.f32.mxu0 %v928
      %1719 = vmatmul.mubr.f32.gmra.mrb[0].mxu0 %v927
      %v1720 = vpop.f32.mrb[0].mxu0
      %v1721 = vadd.f32 %v1331, %v1720
      %v1722 = vpop.f32.mrb[0].mxu0
      %1723 = vmatprep.mubr.f32.mxu0 %v932
      %1724 = vmatmul.mubr.f32.gmra.mrb[0].mxu0 %v931
      %v1725 = vpop.f32.mrb[0].mxu0
      %v1726 = vadd.f32 %v1336, %v1725
      %v1727 = vpop.f32.mrb[0].mxu0
      %1728 = vmatprep.mubr.f32.mxu0 %v936
      %1729 = vmatmul.mubr.f32.gmra.mrb[0].mxu0 %v935
      %v1730 = vpop.f32.mrb[0].mxu0
      %v1731 = vadd.f32 %v1341, %v1730
      %v1732 = vpop.f32.mrb[0].mxu0
      %1733 = vmatprep.mubr.f32.mxu0 %v940
      %1734 = vmatmul.mubr.f32.gmra.mrb[0].mxu0 %v939
      %v1735 = vpop.f32.mrb[0].mxu0
      %v1736 = vadd.f32 %v1346, %v1735
      %v1737 = vpop.f32.mrb[0].mxu0
      %1738 = vmatprep.mubr.f32.mxu0 %v944
      %1739 = vmatmul.mubr.f32.gmra.mrb[0].mxu0 %v943
      %v1740 = vpop.f32.mrb[0].mxu0
      %v1741 = vadd.f32 %v1351, %v1740
      %v1742 = vpop.f32.mrb[0].mxu0
      %1743 = vmatprep.mubr.f32.mxu0 %v948
      %1744 = vmatmul.mubr.f32.gmra.mrb[0].mxu0 %v947
      %v1745 = vpop.f32.mrb[0].mxu0
      %v1746 = vadd.f32 %v1356, %v1745
      %v1747 = vpop.f32.mrb[0].mxu0
      %1748 = vmatprep.mubr.f32.mxu0 %v952
      %1749 = vmatmul.mubr.f32.gmra.mrb[0].mxu0 %v951
      %v1750 = vpop.f32.mrb[0].mxu0
      %v1751 = vadd.f32 %v1361, %v1750
      %v1752 = vpop.f32.mrb[0].mxu0
      %1753 = vmatprep.mubr.f32.mxu0 %v956
      %1754 = vmatmul.mubr.f32.gmra.mrb[0].mxu0 %v955
      %v1755 = vpop.f32.mrb[0].mxu0
      %v1756 = vadd.f32 %v1366, %v1755
      %v1757 = vpop.f32.mrb[0].mxu0
      %1758 = vmatprep.mubr.f32.mxu0 %v960
      %1759 = vmatmul.mubr.f32.gmra.mrb[0].mxu0 %v959
      %v1760 = vpop.f32.mrb[0].mxu0
      %v1761 = vadd.f32 %v1371, %v1760
      %v1762 = vpop.f32.mrb[0].mxu0
      %1763 = vmatprep.mubr.f32.mxu0 %v964
      %1764 = vmatmul.mubr.f32.gmra.mrb[0].mxu0 %v963
      %v1765 = vpop.f32.mrb[0].mxu0
      %v1766 = vadd.f32 %v1376, %v1765
      %v1767 = vpop.f32.mrb[0].mxu0
      %1768 = vmatprep.mubr.f32.mxu0 %v968
      %1769 = vmatmul.mubr.f32.gmra.mrb[0].mxu0 %v967
      %v1770 = vpop.f32.mrb[0].mxu0
      %v1771 = vadd.f32 %v1381, %v1770
      %v1772 = vpop.f32.mrb[0].mxu0
      %1773 = vmatprep.mubr.f32.mxu0 %v972
      %1774 = vmatmul.mubr.f32.gmra.mrb[0].mxu0 %v971
      %v1775 = vpop.f32.mrb[0].mxu0
      %v1776 = vadd.f32 %v1386, %v1775
      %v1777 = vpop.f32.mrb[0].mxu0
      %1778 = vmatprep.mubr.f32.mxu0 %v976
      %1779 = vmatmul.mubr.f32.gmra.mrb[0].mxu0 %v975
      %v1780 = vpop.f32.mrb[0].mxu0
      %v1781 = vadd.f32 %v1391, %v1780
      %v1782 = vpop.f32.mrb[0].mxu0
      %1783 = vmatprep.mubr.f32.mxu0 %v980
      %1784 = vmatmul.mubr.f32.gmra.mrb[0].mxu0 %v979
      %v1785 = vpop.f32.mrb[0].mxu0
      %v1786 = vadd.f32 %v1396, %v1785
      %v1787 = vpop.f32.mrb[0].mxu0
      %1788 = vmatprep.mubr.f32.mxu0 %v984
      %1789 = vmatmul.mubr.f32.gmra.mrb[0].mxu0 %v983
      %v1790 = vpop.f32.mrb[0].mxu0
      %v1791 = vadd.f32 %v1401, %v1790
      %v1792 = vpop.f32.mrb[0].mxu0
      %1793 = vmatprep.mubr.f32.mxu0 %v988
      %1794 = vmatmul.mubr.f32.gmra.mrb[0].mxu0 %v987
      %v1795 = vpop.f32.mrb[0].mxu0
      %v1796 = vadd.f32 %v1406, %v1795
      %v1797 = vpop.f32.mrb[0].mxu0
      %1798 = vmatprep.mubr.f32.mxu0 %v992
      %1799 = vmatmul.mubr.f32.gmra.mrb[0].mxu0 %v991
      %v1800 = vpop.f32.mrb[0].mxu0
      %v1801 = vadd.f32 %v1411, %v1800
      %v1802 = vpop.f32.mrb[0].mxu0
      %1803 = vmatprep.mubr.f32.mxu0 %v996
      %1804 = vmatmul.mubr.f32.gmra.mrb[0].mxu0 %v995
      %v1805 = vpop.f32.mrb[0].mxu0
      %v1806 = vadd.f32 %v1416, %v1805
      %v1807 = vpop.f32.mrb[0].mxu0
      %1808 = vmatprep.mubr.f32.mxu0 %v1000
      %1809 = vmatmul.mubr.f32.gmra.mrb[0].mxu0 %v999
      %v1810 = vpop.f32.mrb[0].mxu0
      %v1811 = vadd.f32 %v1421, %v1810
      %v1812 = vpop.f32.mrb[0].mxu0
      %1813 = vmatprep.mubr.f32.mxu0 %v1004
      %1814 = vmatmul.mubr.f32.gmra.mrb[0].mxu0 %v1003
      %v1815 = vpop.f32.mrb[0].mxu0
      %v1816 = vadd.f32 %v1426, %v1815
      %v1817 = vpop.f32.mrb[0].mxu0
      %1818 = vmatprep.mubr.f32.mxu0 %v1008
      %1819 = vmatmul.mubr.f32.gmra.mrb[0].mxu0 %v1007
      %v1820 = vpop.f32.mrb[0].mxu0
      %v1821 = vadd.f32 %v1431, %v1820
      %v1822 = vpop.f32.mrb[0].mxu0
      %1823 = vmatprep.mubr.f32.mxu0 %v1012
      %1824 = vmatmul.mubr.f32.gmra.mrb[0].mxu0 %v1011
      %v1825 = vpop.f32.mrb[0].mxu0
      %v1826 = vadd.f32 %v1436, %v1825
      %v1827 = vpop.f32.mrb[0].mxu0
      %1828 = vmatprep.mubr.f32.mxu0 %v1016
      %1829 = vmatmul.mubr.f32.gmra.mrb[0].mxu0 %v1015
      %v1830 = vpop.f32.mrb[0].mxu0
      %v1831 = vadd.f32 %v1441, %v1830
      %v1832 = vpop.f32.mrb[0].mxu0
      %1833 = vmatprep.mubr.f32.mxu0 %v1020
      %1834 = vmatmul.mubr.f32.gmra.mrb[0].mxu0 %v1019
      %v1835 = vpop.f32.mrb[0].mxu0
      %v1836 = vadd.f32 %v1446, %v1835
      %v1837 = vpop.f32.mrb[0].mxu0
      %1838 = vmatprep.mubr.f32.mxu0 %v1024
      %1839 = vmatmul.mubr.f32.gmra.mrb[0].mxu0 %v1023
      %v1840 = vpop.f32.mrb[0].mxu0
      %v1841 = vadd.f32 %v1451, %v1840
      %v1842 = vpop.f32.mrb[0].mxu0
      %1843 = vmatprep.mubr.f32.mxu0 %v1028
      %1844 = vmatmul.mubr.f32.gmra.mrb[0].mxu0 %v1027
      %v1845 = vpop.f32.mrb[0].mxu0
      %v1846 = vadd.f32 %v1456, %v1845
      %v1847 = vpop.f32.mrb[0].mxu0
      %1848 = vmatprep.mubr.f32.mxu0 %v1032
      %1849 = vmatmul.mubr.f32.gmra.mrb[0].mxu0 %v1031
      %v1850 = vpop.f32.mrb[0].mxu0
      %v1851 = vadd.f32 %v1461, %v1850
      %v1852 = vpop.f32.mrb[0].mxu0
      %1853 = vmatprep.mubr.f32.mxu0 %v1036
      %1854 = vmatmul.mubr.f32.gmra.mrb[0].mxu0 %v1035
      %v1855 = vpop.f32.mrb[0].mxu0
      %v1856 = vadd.f32 %v1466, %v1855
      %v1857 = vpop.f32.mrb[0].mxu0
      %1858 = vmatprep.mubr.f32.mxu0 %v1040
      %1859 = vmatmul.mubr.f32.gmra.mrb[0].mxu0 %v1039
      %v1860 = vpop.f32.mrb[0].mxu0
      %v1861 = vadd.f32 %v1471, %v1860
      %v1862 = vpop.f32.mrb[0].mxu0
      %1863 = vmatprep.mubr.f32.mxu0 %v1044
      %1864 = vmatmul.mubr.f32.gmra.mrb[0].mxu0 %v1043
      %v1865 = vpop.f32.mrb[0].mxu0
      %v1866 = vadd.f32 %v1476, %v1865
      %v1867 = vpop.f32.mrb[0].mxu0
      %1868 = vmatprep.mubr.f32.mxu0 %v1048
      %1869 = vmatmul.mubr.f32.gmra.mrb[0].mxu0 %v1047
      %v1870 = vpop.f32.mrb[0].mxu0
      %v1871 = vadd.f32 %v1481, %v1870
      %v1872 = vpop.f32.mrb[0].mxu0
      %1873 = vmatprep.mubr.f32.mxu0 %v1052
      %1874 = vmatmul.mubr.f32.gmra.mrb[0].mxu0 %v1051
      %v1875 = vpop.f32.mrb[0].mxu0
      %v1876 = vadd.f32 %v1486, %v1875
      %v1877 = vpop.f32.mrb[0].mxu0
      %1878 = vmatprep.mubr.f32.mxu0 %v1056
      %1879 = vmatmul.mubr.f32.gmra.mrb[0].mxu0 %v1055
      %v1880 = vpop.f32.mrb[0].mxu0
      %v1881 = vadd.f32 %v1491, %v1880
      %v1882 = vpop.f32.mrb[0].mxu0
      %1883 = vmatprep.mubr.f32.mxu0 %v1060
      %1884 = vmatmul.mubr.f32.gmra.mrb[0].mxu0 %v1059
      %v1885 = vpop.f32.mrb[0].mxu0
      %v1886 = vadd.f32 %v1496, %v1885
      %v1887 = vpop.f32.mrb[0].mxu0
      %1888 = vmatprep.mubr.f32.mxu0 %v1064
      %1889 = vmatmul.mubr.f32.gmra.mrb[0].mxu0 %v1063
      %v1890 = vpop.f32.mrb[0].mxu0
      %v1891 = vadd.f32 %v1501, %v1890
      %v1892 = vpop.f32.mrb[0].mxu0
      %1893 = vmatprep.mubr.f32.mxu0 %v1068
      %1894 = vmatmul.mubr.f32.gmra.mrb[0].mxu0 %v1067
      %v1895 = vpop.f32.mrb[0].mxu0
      %v1896 = vadd.f32 %v1506, %v1895
      %v1897 = vpop.f32.mrb[0].mxu0
      %1898 = vmatprep.mubr.f32.mxu0 %v1072
      %1899 = vmatmul.mubr.f32.gmra.mrb[0].mxu0 %v1071
      %v1900 = vpop.f32.mrb[0].mxu0
      %v1901 = vadd.f32 %v1511, %v1900
      %v1902 = vpop.f32.mrb[0].mxu0
      %1903 = vmatprep.mubr.f32.mxu0 %v1076
      %1904 = vmatmul.mubr.f32.gmra.mrb[0].mxu0 %v1075
      %v1905 = vpop.f32.mrb[0].mxu0
      %v1906 = vadd.f32 %v1516, %v1905
      %v1907 = vpop.f32.mrb[0].mxu0
      %1908 = vmatprep.mubr.f32.mxu0 %v1080
      %1909 = vmatmul.mubr.f32.gmra.mrb[0].mxu0 %v1079
      %v1910 = vpop.f32.mrb[0].mxu0
      %v1911 = vadd.f32 %v1521, %v1910
      %v1912 = vpop.f32.mrb[0].mxu0
      %1913 = vmatprep.mubr.f32.mxu0 %v1084
      %1914 = vmatmul.mubr.f32.gmra.mrb[0].mxu0 %v1083
      %v1915 = vpop.f32.mrb[0].mxu0
      %v1916 = vadd.f32 %v1526, %v1915
      %v1917 = vpop.f32.mrb[0].mxu0
      %1918 = vmatprep.mubr.f32.mxu0 %v1088
      %1919 = vmatmul.mubr.f32.gmra.mrb[0].mxu0 %v1087
      %v1920 = vpop.f32.mrb[0].mxu0
      %v1921 = vadd.f32 %v1531, %v1920
      %v1922 = vpop.f32.mrb[0].mxu0
      %1923 = vmatprep.mubr.f32.mxu0 %v1092
      %1924 = vmatmul.mubr.f32.gmra.mrb[0].mxu0 %v1091
      %v1925 = vpop.f32.mrb[0].mxu0
      %v1926 = vadd.f32 %v1536, %v1925
      %v1927 = vpop.f32.mrb[0].mxu0
      %1928 = vmatprep.mubr.f32.mxu0 %v1096
      %1929 = vmatmul.mubr.f32.gmra.mrb[0].mxu0 %v1095
      %v1930 = vpop.f32.mrb[0].mxu0
      %v1931 = vadd.f32 %v1541, %v1930
      %v1932 = vpop.f32.mrb[0].mxu0
      %1933 = vmatprep.mubr.f32.mxu0 %v1100
      %1934 = vmatmul.mubr.f32.gmra.mrb[0].mxu0 %v1099
      %v1935 = vpop.f32.mrb[0].mxu0
      %v1936 = vadd.f32 %v1546, %v1935
      %v1937 = vpop.f32.mrb[0].mxu0
      %1938 = vmatprep.mubr.f32.mxu0 %v1104
      %1939 = vmatmul.mubr.f32.gmra.mrb[0].mxu0 %v1103
      %v1940 = vpop.f32.mrb[0].mxu0
      %v1941 = vadd.f32 %v1551, %v1940
      %v1942 = vpop.f32.mrb[0].mxu0
      %1943 = vmatprep.mubr.f32.mxu0 %v1108
      %1944 = vmatmul.mubr.f32.gmra.mrb[0].mxu0 %v1107
      %v1945 = vpop.f32.mrb[0].mxu0
      %v1946 = vadd.f32 %v1556, %v1945
      %v1947 = vpop.f32.mrb[0].mxu0
      %1948 = vmatprep.mubr.f32.mxu0 %v1112
      %1949 = vmatmul.mubr.f32.gmra.mrb[0].mxu0 %v1111
      %v1950 = vpop.f32.mrb[0].mxu0
      %v1951 = vadd.f32 %v1561, %v1950
      %v1952 = vpop.f32.mrb[0].mxu0
      %1953 = vmatprep.mubr.f32.mxu0 %v1116
      %1954 = vmatmul.mubr.f32.gmra.mrb[0].mxu0 %v1115
      %v1955 = vpop.f32.mrb[0].mxu0
      %v1956 = vadd.f32 %v1566, %v1955
      %v1957 = vpop.f32.mrb[0].mxu0
      %1958 = vmatprep.mubr.f32.mxu0 %v1120
      %1959 = vmatmul.mubr.f32.gmra.mrb[0].mxu0 %v1119
      %v1960 = vpop.f32.mrb[0].mxu0
      %v1961 = vadd.f32 %v1571, %v1960
      %v1962 = vpop.f32.mrb[0].mxu0
      %1963 = vmatprep.mubr.f32.mxu0 %v1124
      %1964 = vmatmul.mubr.f32.gmra.mrb[0].mxu0 %v1123
      %v1965 = vpop.f32.mrb[0].mxu0
      %v1966 = vadd.f32 %v1576, %v1965
      %v1967 = vpop.f32.mrb[0].mxu0
      %1968 = vdwg.mxu0
      %s1969 = scalar_lea.vmem %s3, %s253
      %v1970 = vld [vmem:[%s1969] sm:$0xff]
      %v1971 = vld [vmem:[%s1969 + $0x8] sm:$0xff]
      %v1972 = vld [vmem:[%s1969 + $0x10] sm:$0xff]
      %v1973 = vld [vmem:[%s1969 + $0x18] sm:$0xff]
      %v1974 = vld [vmem:[%s1969 + $0x20] sm:$0xff]
      %v1975 = vld [vmem:[%s1969 + $0x28] sm:$0xff]
      %v1976 = vld [vmem:[%s1969 + $0x30] sm:$0xff]
      %v1977 = vld [vmem:[%s1969 + $0x38] sm:$0xff]
      %v1978 = vld [vmem:[%s1969 + $0x40] sm:$0xff]
      %v1979 = vld [vmem:[%s1969 + $0x48] sm:$0xff]
      %v1980 = vld [vmem:[%s1969 + $0x50] sm:$0xff]
      %v1981 = vld [vmem:[%s1969 + $0x58] sm:$0xff]
      %v1982 = vld [vmem:[%s1969 + $0x60] sm:$0xff]
      %v1983 = vld [vmem:[%s1969 + $0x68] sm:$0xff]
      %v1984 = vld [vmem:[%s1969 + $0x70] sm:$0xff]
      %v1985 = vld [vmem:[%s1969 + $0x78] sm:$0xff]
      %v1986 = vld [vmem:[%s1969 + $0x80] sm:$0xff]
      %v1987 = vld [vmem:[%s1969 + $0x88] sm:$0xff]
      %v1988 = vld [vmem:[%s1969 + $0x90] sm:$0xff]
      %v1989 = vld [vmem:[%s1969 + $0x98] sm:$0xff]
      %v1990 = vld [vmem:[%s1969 + $0xa0] sm:$0xff]
      %v1991 = vld [vmem:[%s1969 + $0xa8] sm:$0xff]
      %v1992 = vld [vmem:[%s1969 + $0xb0] sm:$0xff]
      %v1993 = vld [vmem:[%s1969 + $0xb8] sm:$0xff]
      %v1994 = vld [vmem:[%s1969 + $0xc0] sm:$0xff]
      %v1995 = vld [vmem:[%s1969 + $0xc8] sm:$0xff]
      %v1996 = vld [vmem:[%s1969 + $0xd0] sm:$0xff]
      %v1997 = vld [vmem:[%s1969 + $0xd8] sm:$0xff]
      %v1998 = vld [vmem:[%s1969 + $0xe0] sm:$0xff]
      %v1999 = vld [vmem:[%s1969 + $0xe8] sm:$0xff]
      %v2000 = vld [vmem:[%s1969 + $0xf0] sm:$0xff]
      %v2001 = vld [vmem:[%s1969 + $0xf8] sm:$0xff]
      %v2002 = vld [vmem:[%s1969 + $0x100] sm:$0xff]
      %v2003 = vld [vmem:[%s1969 + $0x108] sm:$0xff]
      %v2004 = vld [vmem:[%s1969 + $0x110] sm:$0xff]
      %v2005 = vld [vmem:[%s1969 + $0x118] sm:$0xff]
      %v2006 = vld [vmem:[%s1969 + $0x120] sm:$0xff]
      %v2007 = vld [vmem:[%s1969 + $0x128] sm:$0xff]
      %v2008 = vld [vmem:[%s1969 + $0x130] sm:$0xff]
      %v2009 = vld [vmem:[%s1969 + $0x138] sm:$0xff]
      %v2010 = vld [vmem:[%s1969 + $0x140] sm:$0xff]
      %v2011 = vld [vmem:[%s1969 + $0x148] sm:$0xff]
      %v2012 = vld [vmem:[%s1969 + $0x150] sm:$0xff]
      %v2013 = vld [vmem:[%s1969 + $0x158] sm:$0xff]
      %v2014 = vld [vmem:[%s1969 + $0x160] sm:$0xff]
      %v2015 = vld [vmem:[%s1969 + $0x168] sm:$0xff]
      %v2016 = vld [vmem:[%s1969 + $0x170] sm:$0xff]
      %v2017 = vld [vmem:[%s1969 + $0x178] sm:$0xff]
      %v2018 = vld [vmem:[%s1969 + $0x180] sm:$0xff]
      %v2019 = vld [vmem:[%s1969 + $0x188] sm:$0xff]
      %v2020 = vld [vmem:[%s1969 + $0x190] sm:$0xff]
      %v2021 = vld [vmem:[%s1969 + $0x198] sm:$0xff]
      %v2022 = vld [vmem:[%s1969 + $0x1a0] sm:$0xff]
      %v2023 = vld [vmem:[%s1969 + $0x1a8] sm:$0xff]
      %v2024 = vld [vmem:[%s1969 + $0x1b0] sm:$0xff]
      %v2025 = vld [vmem:[%s1969 + $0x1b8] sm:$0xff]
      %v2026 = vld [vmem:[%s1969 + $0x1c0] sm:$0xff]
      %v2027 = vld [vmem:[%s1969 + $0x1c8] sm:$0xff]
      %v2028 = vld [vmem:[%s1969 + $0x1d0] sm:$0xff]
      %v2029 = vld [vmem:[%s1969 + $0x1d8] sm:$0xff]
      %v2030 = vld [vmem:[%s1969 + $0x1e0] sm:$0xff]
      %v2031 = vld [vmem:[%s1969 + $0x1e8] sm:$0xff]
      %v2032 = vld [vmem:[%s1969 + $0x1f0] sm:$0xff]
      %v2033 = vld [vmem:[%s1969 + $0x1f8] sm:$0xff]
      %v2034 = vld [vmem:[%s1969 + $0x200] sm:$0xff]
      %v2035 = vadd.f32 %v1970, %v1646
      %v2036 = vadd.f32 %v1971, %v1651
      %v2037 = vadd.f32 %v1972, %v1656
      %v2038 = vadd.f32 %v1973, %v1661
      %v2039 = vadd.f32 %v1974, %v1666
      %v2040 = vadd.f32 %v1975, %v1671
      %v2041 = vadd.f32 %v1976, %v1676
      %v2042 = vadd.f32 %v1977, %v1681
      %v2043 = vadd.f32 %v1978, %v1686
      %v2044 = vadd.f32 %v1979, %v1691
      %v2045 = vadd.f32 %v1980, %v1696
      %v2046 = vadd.f32 %v1981, %v1701
      %v2047 = vadd.f32 %v1982, %v1706
      %v2048 = vadd.f32 %v1983, %v1711
      %v2049 = vadd.f32 %v1984, %v1716
      %v2050 = vadd.f32 %v1985, %v1721
      %v2051 = vadd.f32 %v1986, %v1726
      %v2052 = vadd.f32 %v1987, %v1731
      %v2053 = vadd.f32 %v1988, %v1736
      %v2054 = vadd.f32 %v1989, %v1741
      %v2055 = vadd.f32 %v1990, %v1746
      %v2056 = vadd.f32 %v1991, %v1751
      %v2057 = vadd.f32 %v1992, %v1756
      %v2058 = vadd.f32 %v1993, %v1761
      %v2059 = vadd.f32 %v1994, %v1766
      %v2060 = vadd.f32 %v1995, %v1771
      %v2061 = vadd.f32 %v1996, %v1776
      %v2062 = vadd.f32 %v1997, %v1781
      %v2063 = vadd.f32 %v1998, %v1786
      %v2064 = vadd.f32 %v1999, %v1791
      %v2065 = vadd.f32 %v2000, %v1796
      %v2066 = vadd.f32 %v2001, %v1801
      %v2067 = vadd.f32 %v2002, %v1806
      %v2068 = vadd.f32 %v2003, %v1811
      %v2069 = vadd.f32 %v2004, %v1816
      %v2070 = vadd.f32 %v2005, %v1821
      %v2071 = vadd.f32 %v2006, %v1826
      %v2072 = vadd.f32 %v2007, %v1831
      %v2073 = vadd.f32 %v2008, %v1836
      %v2074 = vadd.f32 %v2009, %v1841
      %v2075 = vadd.f32 %v2010, %v1846
      %v2076 = vadd.f32 %v2011, %v1851
      %v2077 = vadd.f32 %v2012, %v1856
      %v2078 = vadd.f32 %v2013, %v1861
      %v2079 = vadd.f32 %v2014, %v1866
      %v2080 = vadd.f32 %v2015, %v1871
      %v2081 = vadd.f32 %v2016, %v1876
      %v2082 = vadd.f32 %v2017, %v1881
      %v2083 = vadd.f32 %v2018, %v1886
      %v2084 = vadd.f32 %v2019, %v1891
      %v2085 = vadd.f32 %v2020, %v1896
      %v2086 = vadd.f32 %v2021, %v1901
      %v2087 = vadd.f32 %v2022, %v1906
      %v2088 = vadd.f32 %v2023, %v1911
      %v2089 = vadd.f32 %v2024, %v1916
      %v2090 = vadd.f32 %v2025, %v1921
      %v2091 = vadd.f32 %v2026, %v1926
      %v2092 = vadd.f32 %v2027, %v1931
      %v2093 = vadd.f32 %v2028, %v1936
      %v2094 = vadd.f32 %v2029, %v1941
      %v2095 = vadd.f32 %v2030, %v1946
      %v2096 = vadd.f32 %v2031, %v1951
      %v2097 = vadd.f32 %v2032, %v1956
      %v2098 = vadd.f32 %v2033, %v1961
      %v2099 = vadd.f32 %v2034, %v1966
      %vm2100 = vcmask 31744
      %2101 = vst.msk [vmem:[%s1969] sm:$0xff] %vm2100, %v2035
      %2102 = vst.msk [vmem:[%s1969 + $0x8] sm:$0xff] %vm2100, %v2036
      %2103 = vst.msk [vmem:[%s1969 + $0x10] sm:$0xff] %vm2100, %v2037
      %2104 = vst.msk [vmem:[%s1969 + $0x18] sm:$0xff] %vm2100, %v2038
      %2105 = vst.msk [vmem:[%s1969 + $0x20] sm:$0xff] %vm2100, %v2039
      %2106 = vst.msk [vmem:[%s1969 + $0x28] sm:$0xff] %vm2100, %v2040
      %2107 = vst.msk [vmem:[%s1969 + $0x30] sm:$0xff] %vm2100, %v2041
      %2108 = vst.msk [vmem:[%s1969 + $0x38] sm:$0xff] %vm2100, %v2042
      %2109 = vst.msk [vmem:[%s1969 + $0x40] sm:$0xff] %vm2100, %v2043
      %2110 = vst.msk [vmem:[%s1969 + $0x48] sm:$0xff] %vm2100, %v2044
      %2111 = vst.msk [vmem:[%s1969 + $0x50] sm:$0xff] %vm2100, %v2045
      %2112 = vst.msk [vmem:[%s1969 + $0x58] sm:$0xff] %vm2100, %v2046
      %2113 = vst.msk [vmem:[%s1969 + $0x60] sm:$0xff] %vm2100, %v2047
      %2114 = vst.msk [vmem:[%s1969 + $0x68] sm:$0xff] %vm2100, %v2048
      %2115 = vst.msk [vmem:[%s1969 + $0x70] sm:$0xff] %vm2100, %v2049
      %2116 = vst.msk [vmem:[%s1969 + $0x78] sm:$0xff] %vm2100, %v2050
      %2117 = vst.msk [vmem:[%s1969 + $0x80] sm:$0xff] %vm2100, %v2051
      %2118 = vst.msk [vmem:[%s1969 + $0x88] sm:$0xff] %vm2100, %v2052
      %2119 = vst.msk [vmem:[%s1969 + $0x90] sm:$0xff] %vm2100, %v2053
      %2120 = vst.msk [vmem:[%s1969 + $0x98] sm:$0xff] %vm2100, %v2054
      %2121 = vst.msk [vmem:[%s1969 + $0xa0] sm:$0xff] %vm2100, %v2055
      %2122 = vst.msk [vmem:[%s1969 + $0xa8] sm:$0xff] %vm2100, %v2056
      %2123 = vst.msk [vmem:[%s1969 + $0xb0] sm:$0xff] %vm2100, %v2057
      %2124 = vst.msk [vmem:[%s1969 + $0xb8] sm:$0xff] %vm2100, %v2058
      %2125 = vst.msk [vmem:[%s1969 + $0xc0] sm:$0xff] %vm2100, %v2059
      %2126 = vst.msk [vmem:[%s1969 + $0xc8] sm:$0xff] %vm2100, %v2060
      %2127 = vst.msk [vmem:[%s1969 + $0xd0] sm:$0xff] %vm2100, %v2061
      %2128 = vst.msk [vmem:[%s1969 + $0xd8] sm:$0xff] %vm2100, %v2062
      %2129 = vst.msk [vmem:[%s1969 + $0xe0] sm:$0xff] %vm2100, %v2063
      %2130 = vst.msk [vmem:[%s1969 + $0xe8] sm:$0xff] %vm2100, %v2064
      %2131 = vst.msk [vmem:[%s1969 + $0xf0] sm:$0xff] %vm2100, %v2065
      %2132 = vst.msk [vmem:[%s1969 + $0xf8] sm:$0xff] %vm2100, %v2066
      %2133 = vst.msk [vmem:[%s1969 + $0x100] sm:$0xff] %vm2100, %v2067
      %2134 = vst.msk [vmem:[%s1969 + $0x108] sm:$0xff] %vm2100, %v2068
      %2135 = vst.msk [vmem:[%s1969 + $0x110] sm:$0xff] %vm2100, %v2069
      %2136 = vst.msk [vmem:[%s1969 + $0x118] sm:$0xff] %vm2100, %v2070
      %2137 = vst.msk [vmem:[%s1969 + $0x120] sm:$0xff] %vm2100, %v2071
      %2138 = vst.msk [vmem:[%s1969 + $0x128] sm:$0xff] %vm2100, %v2072
      %2139 = vst.msk [vmem:[%s1969 + $0x130] sm:$0xff] %vm2100, %v2073
      %2140 = vst.msk [vmem:[%s1969 + $0x138] sm:$0xff] %vm2100, %v2074
      %2141 = vst.msk [vmem:[%s1969 + $0x140] sm:$0xff] %vm2100, %v2075
      %2142 = vst.msk [vmem:[%s1969 + $0x148] sm:$0xff] %vm2100, %v2076
      %2143 = vst.msk [vmem:[%s1969 + $0x150] sm:$0xff] %vm2100, %v2077
      %2144 = vst.msk [vmem:[%s1969 + $0x158] sm:$0xff] %vm2100, %v2078
      %2145 = vst.msk [vmem:[%s1969 + $0x160] sm:$0xff] %vm2100, %v2079
      %2146 = vst.msk [vmem:[%s1969 + $0x168] sm:$0xff] %vm2100, %v2080
      %2147 = vst.msk [vmem:[%s1969 + $0x170] sm:$0xff] %vm2100, %v2081
      %2148 = vst.msk [vmem:[%s1969 + $0x178] sm:$0xff] %vm2100, %v2082
      %2149 = vst.msk [vmem:[%s1969 + $0x180] sm:$0xff] %vm2100, %v2083
      %2150 = vst.msk [vmem:[%s1969 + $0x188] sm:$0xff] %vm2100, %v2084
      %2151 = vst.msk [vmem:[%s1969 + $0x190] sm:$0xff] %vm2100, %v2085
      %2152 = vst.msk [vmem:[%s1969 + $0x198] sm:$0xff] %vm2100, %v2086
      %2153 = vst.msk [vmem:[%s1969 + $0x1a0] sm:$0xff] %vm2100, %v2087
      %2154 = vst.msk [vmem:[%s1969 + $0x1a8] sm:$0xff] %vm2100, %v2088
      %2155 = vst.msk [vmem:[%s1969 + $0x1b0] sm:$0xff] %vm2100, %v2089
      %2156 = vst.msk [vmem:[%s1969 + $0x1b8] sm:$0xff] %vm2100, %v2090
      %2157 = vst.msk [vmem:[%s1969 + $0x1c0] sm:$0xff] %vm2100, %v2091
      %2158 = vst.msk [vmem:[%s1969 + $0x1c8] sm:$0xff] %vm2100, %v2092
      %2159 = vst.msk [vmem:[%s1969 + $0x1d0] sm:$0xff] %vm2100, %v2093
      %2160 = vst.msk [vmem:[%s1969 + $0x1d8] sm:$0xff] %vm2100, %v2094
      %2161 = vst.msk [vmem:[%s1969 + $0x1e0] sm:$0xff] %vm2100, %v2095
      %2162 = vst.msk [vmem:[%s1969 + $0x1e8] sm:$0xff] %vm2100, %v2096
      %2163 = vst.msk [vmem:[%s1969 + $0x1f0] sm:$0xff] %vm2100, %v2097
      %2164 = vst.msk [vmem:[%s1969 + $0x1f8] sm:$0xff] %vm2100, %v2098
      %2165 = vst.msk [vmem:[%s1969 + $0x200] sm:$0xff] %vm2100, %v2099
      // Predicated region
      $region33: #{tpu_custom_call.1} parent=27 // pred_check
        %p2166 = pneg %p85
      $region34: #{tpu_custom_call.1} parent=27 // pred_check_branch
        %2168 = sbr.rel (%p2166) target = $region36
      $region35: #{tpu_custom_call.1} parent=27 // pred_region
        _
      $region36: #{tpu_custom_call.1} parent=27 // pred_fallthru
        _
      // Predicated region
      $region37: #{tpu_custom_call.1} parent=27 // pred_check
        %p2169 = pneg %p85
      $region38: #{tpu_custom_call.1} parent=27 // pred_check_branch
        %2171 = sbr.rel (%p2169) target = $region40
      $region39: #{tpu_custom_call.1} parent=27 // pred_region
        _
      $region40: #{tpu_custom_call.1} parent=27 // pred_fallthru
        _
    $region28: #{tpu_custom_call.1} parent=5 // pred_fallthru
      _
    %p2172 = scmp.le.s32.totalorder 2, %s15
    // Predicated region
    $region41: #{tpu_custom_call.1} parent=5 // pred_check
      %p2173 = pneg %p2172
    $region42: #{tpu_custom_call.1} parent=5 // pred_check_branch
      %2175 = sbr.rel (%p2173) target = $region44
    $region43: #{tpu_custom_call.1} parent=5 // pred_region
      %s2176 = ssub.s32 %s15, 2
    $region44: #{tpu_custom_call.1} parent=5 // pred_fallthru
      _
  $region6: #{tpu_custom_call.1} parent=0 // loop_footer
    %s19 = sadd.s32 1, %s15
  $region7: #{tpu_custom_call.1} parent=0 // loop_footer_branch
    %14 = sbr.rel target = $region3
  $region8: #{tpu_custom_call.1} parent=0 // loop_exit
    _

</llo_original>
